<compile_context>
chip_gen: v5e
topology: v5e:2x2
jax: 0.10.0
libtpu: 0.0.40
codegen_flags: <defaults>
</compile_context>

<pallas_src>
import functools

import jax
import jax.numpy as jnp
from jax import lax
from jax.experimental import pallas as pl
from jax.experimental.pallas import tpu as pltpu


def _pick_tile(n: int, preferred: int = 512) -> int:
    """Largest multiple of 128 that divides n and is <= preferred, else n."""
    for t in range(min(preferred, n), 127, -128):
        if n % t == 0:
            return t
    return n


# ----------------------------------------------------------------------------
# Kernel 1: hidden = relu((adj @ X) @ W0), row-tiled with K-tiled accumulator.
# ----------------------------------------------------------------------------
def _hidden_kernel(adj_ref, x_ref, w0_ref, hid_ref, acc_ref):
    k = pl.program_id(1)

    @pl.when(k == 0)
    def _():
        acc_ref[...] = jnp.zeros_like(acc_ref)

    # acc (tm, d_in) += adj_tile (tm, tk) @ x_tile (tk, d_in); K = N contraction.
    acc_ref[...] += jnp.dot(adj_ref[...], x_ref[...],
                            preferred_element_type=jnp.float32)

    @pl.when(k == pl.num_programs(1) - 1)
    def _():
        ax = acc_ref[...].astype(jnp.bfloat16)
        h = jnp.dot(ax, w0_ref[...], preferred_element_type=jnp.float32)
        hid_ref[...] = jnp.maximum(h, 0.0).astype(hid_ref.dtype)


# ----------------------------------------------------------------------------
# Kernel 2: Z = noise * exp((adj@hidden)@W_sig) + (adj@hidden)@W_mu,
#           row-tiled with a single shared K-tiled accumulator.
# ----------------------------------------------------------------------------
def _z_kernel(adj_ref, hid_ref, wmu_ref, wsig_ref, noise_ref, z_ref, acc_ref):
    k = pl.program_id(1)

    @pl.when(k == 0)
    def _():
        acc_ref[...] = jnp.zeros_like(acc_ref)

    # acc (tm, h1) += adj_tile (tm, tk) @ hidden_tile (tk, h1)
    acc_ref[...] += jnp.dot(adj_ref[...], hid_ref[...],
                            preferred_element_type=jnp.float32)

    @pl.when(k == pl.num_programs(1) - 1)
    def _():
        ah = acc_ref[...].astype(jnp.bfloat16)
        mean = jnp.dot(ah, wmu_ref[...], preferred_element_type=jnp.float32)
        logstd = jnp.dot(ah, wsig_ref[...], preferred_element_type=jnp.float32)
        # Note: exp(logstd) intentionally unclamped, matching the reference.
        z_ref[...] = (noise_ref[...] * jnp.exp(logstd) + mean).astype(z_ref.dtype)


# ----------------------------------------------------------------------------
# Kernel 3: A_pred tile (tm, tn) = sigmoid(Z_i @ Z_j.T); lane-dense bf16 output.
# ----------------------------------------------------------------------------
def _decode_kernel(zi_ref, zj_ref, a_ref, *, apply_sigmoid: bool):
    logits = lax.dot_general(
        zi_ref[...], zj_ref[...],
        dimension_numbers=(((1,), (1,)), ((), ())),   # contract last dims: Z @ Z.T
        preferred_element_type=jnp.float32,
    )
    out = jax.nn.sigmoid(logits) if apply_sigmoid else logits
    a_ref[...] = out.astype(a_ref.dtype)


# ----------------------------------------------------------------------------
# Wrapper: three tiled pallas_calls (2 adj passes + decode).
# ----------------------------------------------------------------------------
def vgae_forward(adj, x, w0, w_mu, w_sig, noise, *,
                 a_pred_dtype=jnp.bfloat16, apply_sigmoid: bool = True):
    n = adj.shape[0]
    d_in = x.shape[1]
    h1 = w0.shape[1]
    h2 = w_mu.shape[1]

    # bf16 operands for the MXU / HBM path; fp32 accumulation inside kernels.
    adj_b = adj.astype(jnp.bfloat16)
    x_b = x.astype(jnp.bfloat16)
    w0_b = w0.astype(jnp.bfloat16)
    wmu_b = w_mu.astype(jnp.bfloat16)
    wsig_b = w_sig.astype(jnp.bfloat16)

    tm = _pick_tile(n)   # row tile of adj / A_pred
    tk = _pick_tile(n)   # contraction tile over adj columns
    tn = _pick_tile(n)   # column tile of A_pred (multiple of 128 -> unmasked vst)

    # ---- layer 1: hidden = relu((adj @ X) @ W0) ------------------------------
    hidden = pl.pallas_call(
        _hidden_kernel,
        out_shape=jax.ShapeDtypeStruct((n, h1), jnp.bfloat16),
        grid_spec=pltpu.PrefetchScalarGridSpec(
            num_scalar_prefetch=0,
            grid=(n // tm, n // tk),
            in_specs=[
                pl.BlockSpec((tm, tk), lambda i, k: (i, k)),      # adj
                pl.BlockSpec((tk, d_in), lambda i, k: (k, 0)),    # X
                pl.BlockSpec((d_in, h1), lambda i, k: (0, 0)),    # W0 (whole)
            ],
            out_specs=pl.BlockSpec((tm, h1), lambda i, k: (i, 0)),
            scratch_shapes=[pltpu.VMEM((tm, d_in), jnp.float32)],
        ),
        compiler_params=pltpu.CompilerParams(
            dimension_semantics=("parallel", "arbitrary")),
    )(adj_b, x_b, w0_b)

    # ---- layer 2 + reparameterize: Z -----------------------------------------
    z = pl.pallas_call(
        _z_kernel,
        out_shape=jax.ShapeDtypeStruct((n, h2), jnp.float32),
        grid_spec=pltpu.PrefetchScalarGridSpec(
            num_scalar_prefetch=0,
            grid=(n // tm, n // tk),
            in_specs=[
                pl.BlockSpec((tm, tk), lambda i, k: (i, k)),      # adj
                pl.BlockSpec((tk, h1), lambda i, k: (k, 0)),      # hidden
                pl.BlockSpec((h1, h2), lambda i, k: (0, 0)),      # W_mu (whole)
                pl.BlockSpec((h1, h2), lambda i, k: (0, 0)),      # W_sig (whole)
                pl.BlockSpec((tm, h2), lambda i, k: (i, 0)),      # noise
            ],
            out_specs=pl.BlockSpec((tm, h2), lambda i, k: (i, 0)),
            scratch_shapes=[pltpu.VMEM((tm, h1), jnp.float32)],
        ),
        compiler_params=pltpu.CompilerParams(
            dimension_semantics=("parallel", "arbitrary")),
    )(adj_b, hidden, wmu_b, wsig_b, noise)

    # ---- decode: A_pred = sigmoid(Z @ Z.T), (i, j) tiles ----------------------
    a_pred = pl.pallas_call(
        functools.partial(_decode_kernel, apply_sigmoid=apply_sigmoid),
        out_shape=jax.ShapeDtypeStruct((n, n), a_pred_dtype),
        grid_spec=pltpu.PrefetchScalarGridSpec(
            num_scalar_prefetch=0,
            grid=(n // tm, n // tn),
            in_specs=[
                pl.BlockSpec((tm, h2), lambda i, j: (i, 0)),      # Z row tile
                pl.BlockSpec((tn, h2), lambda i, j: (j, 0)),      # Z col tile
            ],
            out_specs=pl.BlockSpec((tm, tn), lambda i, j: (i, j)),
        ),
        compiler_params=pltpu.CompilerParams(
            dimension_semantics=("parallel", "parallel")),
    )(z, z)

    return z, a_pred


# ----------------------------------------------------------------------------
# Helpers / reference
# ----------------------------------------------------------------------------
def glorot_init(key, input_dim, output_dim):
    init_range = jnp.sqrt(6.0 / (input_dim + output_dim))
    u = jax.random.uniform(key, (input_dim, output_dim), dtype=jnp.float32)
    return u * 2.0 * init_range - init_range


def vgae_forward_ref(adj, x, w0, w_mu, w_sig, noise):
    hidden = jnp.maximum(adj @ (x @ w0), 0.0)
    mean = adj @ (hidden @ w_mu)
    logstd = adj @ (hidden @ w_sig)
    z = noise * jnp.exp(logstd) + mean
    a_pred = jax.nn.sigmoid(z @ z.T)
    return z, a_pred


if __name__ == "__main__":
    # Small, deterministic problem sizes. N=128 -> single-tile grids, lane-dense A_pred.
    N = 128
    INPUT_DIM = 16
    HIDDEN1_DIM = 32
    HIDDEN2_DIM = 16

    key = jax.random.PRNGKey(0)
    k_x, k_adj, k_w0, k_wmu, k_wsig, k_noise = jax.random.split(key, 6)

    # Node features and a symmetric row-normalized adjacency with self loops.
    x = jax.random.normal(k_x, (N, INPUT_DIM), dtype=jnp.float32)
    a_raw = (jax.random.uniform(k_adj, (N, N)) > 0.9).astype(jnp.float32)
    a_sym = jnp.maximum(a_raw, a_raw.T) + jnp.eye(N, dtype=jnp.float32)
    adj = a_sym / jnp.sum(a_sym, axis=1, keepdims=True)

    # Glorot-initialized GCN weights (deterministic, in-script).
    w0 = glorot_init(k_w0, INPUT_DIM, HIDDEN1_DIM)
    w_mu = glorot_init(k_wmu, HIDDEN1_DIM, HIDDEN2_DIM)
    w_sig = glorot_init(k_wsig, HIDDEN1_DIM, HIDDEN2_DIM)

    # Laplace(0, 1) noise, matching torch.distributions.laplace sampling.
    noise = jax.random.laplace(k_noise, (N, HIDDEN2_DIM), dtype=jnp.float32)

    z, a_pred = jax.jit(vgae_forward)(adj, x, w0, w_mu, w_sig, noise)
    jax.block_until_ready((z, a_pred))

    # Correctness against plain-JAX fp32 reference (bf16 MXU path -> loose tol).
    z_ref, a_ref = vgae_forward_ref(adj, x, w0, w_mu, w_sig, noise)
    assert z.shape == (N, HIDDEN2_DIM)
    assert a_pred.shape == (N, N)
    a_pred_f32 = a_pred.astype(jnp.float32)
    assert bool(jnp.all(jnp.isfinite(a_pred_f32)))
    assert bool(jnp.allclose(z, z_ref, atol=2e-2, rtol=2e-2))
    assert bool(jnp.allclose(a_pred_f32, a_ref, atol=5e-2, rtol=5e-2))
    print("KERNEL_OK")
</pallas_src>

<mosaic_0001>
module attributes {stable_mosaic.version = 11 : i64} {
  func.func @_z_kernel(%arg0: i32, %arg1: i32, %arg2: memref<128x128xbf16, #tpu.memory_space<vmem>>, %arg3: memref<128x32xbf16, #tpu.memory_space<vmem>>, %arg4: memref<32x16xbf16, #tpu.memory_space<vmem>>, %arg5: memref<32x16xbf16, #tpu.memory_space<vmem>>, %arg6: memref<128x16xf32, #tpu.memory_space<vmem>>, %arg7: memref<128x16xf32, #tpu.memory_space<vmem>>, %arg8: memref<128x32xf32, #tpu.memory_space<vmem>>) attributes {dimension_semantics = [#tpu.dimension_semantics<parallel>, #tpu.dimension_semantics<arbitrary>], iteration_bounds = array<i64: 1, 1>, scalar_prefetch = 0 : i64, scratch_operands = 1 : i64, tpu.core_type = #tpu.core_type<tc>, window_params = [{transform_indices = @transform_0, window_bounds = array<i64: 128, 128>}, {transform_indices = @transform_1, window_bounds = array<i64: 128, 32>}, {pipeline_mode = #tpu.pipeline_mode<synchronous>, transform_indices = @transform_2, window_bounds = array<i64: 32, 16>}, {pipeline_mode = #tpu.pipeline_mode<synchronous>, transform_indices = @transform_3, window_bounds = array<i64: 32, 16>}, {transform_indices = @transform_4, window_bounds = array<i64: 128, 16>}, {transform_indices = @transform_5, window_bounds = array<i64: 128, 16>}]} {
    %c0_i32 = arith.constant 0 : i32
    %0 = arith.cmpi eq, %arg1, %c0_i32 : i32
    %1 = arith.extui %0 : i1 to i32
    %c0_i32_0 = arith.constant 0 : i32
    %2 = arith.cmpi ne, %1, %c0_i32_0 : i32
    scf.if %2 {
      %cst_10 = arith.constant 0.000000e+00 : f32
      %12 = vector.broadcast %cst_10 : f32 to vector<128x32xf32>
      %c0_11 = arith.constant 0 : index
      %c0_12 = arith.constant 0 : index
      %13 = vector.load %arg8[%c0_11, %c0_12] : memref<128x32xf32, #tpu.memory_space<vmem>>, vector<128x32xf32>
      tpu.vector_store %arg8[%c0_11, %c0_12], %12 {strides = array<i32>} : memref<128x32xf32, #tpu.memory_space<vmem>>, vector<128x32xf32>,
    } else {
    }
    %c0 = arith.constant 0 : index
    %c0_1 = arith.constant 0 : index
    %3 = vector.load %arg8[%c0, %c0_1] : memref<128x32xf32, #tpu.memory_space<vmem>>, vector<128x32xf32>
    %c0_2 = arith.constant 0 : index
    %c0_3 = arith.constant 0 : index
    %4 = vector.load %arg2[%c0_2, %c0_3] : memref<128x128xbf16, #tpu.memory_space<vmem>>, vector<128x128xbf16>
    %c0_4 = arith.constant 0 : index
    %c0_5 = arith.constant 0 : index
    %5 = vector.load %arg3[%c0_4, %c0_5] : memref<128x32xbf16, #tpu.memory_space<vmem>>, vector<128x32xbf16>
    %cst = arith.constant dense<0.000000e+00> : vector<128x32xf32>
    %6 = tpu.matmul %4, %5, %cst {dimension_numbers = #tpu.dot_dimension_numbers<[1], [0], [0], [1], [0, 0, 1, 1], [], []>} : vector<128x128xbf16>, vector<128x32xbf16>, vector<128x32xf32> -> vector<128x32xf32>
    %7 = arith.addf %3, %6 : vector<128x32xf32>
    %c0_6 = arith.constant 0 : index
    %c0_7 = arith.constant 0 : index
    %8 = vector.load %arg8[%c0_6, %c0_7] : memref<128x32xf32, #tpu.memory_space<vmem>>, vector<128x32xf32>
    tpu.vector_store %arg8[%c0_6, %c0_7], %7 {strides = array<i32>} : memref<128x32xf32, #tpu.memory_space<vmem>>, vector<128x32xf32>,
    %c0_i32_8 = arith.constant 0 : i32
    %9 = arith.cmpi eq, %arg1, %c0_i32_8 : i32
    %10 = arith.extui %9 : i1 to i32
    %c0_i32_9 = arith.constant 0 : i32
    %11 = arith.cmpi ne, %10, %c0_i32_9 : i32
    scf.if %11 {
      %c0_10 = arith.constant 0 : index
      %c0_11 = arith.constant 0 : index
      %12 = vector.load %arg8[%c0_10, %c0_11] : memref<128x32xf32, #tpu.memory_space<vmem>>, vector<128x32xf32>
      %13 = arith.truncf %12 : vector<128x32xf32> to vector<128x32xbf16>
      %c0_12 = arith.constant 0 : index
      %c0_13 = arith.constant 0 : index
      %14 = vector.load %arg4[%c0_12, %c0_13] : memref<32x16xbf16, #tpu.memory_space<vmem>>, vector<32x16xbf16>
      %cst_14 = arith.constant dense<0.000000e+00> : vector<128x16xf32>
      %15 = tpu.matmul %13, %14, %cst_14 {dimension_numbers = #tpu.dot_dimension_numbers<[1], [0], [0], [1], [0, 0, 1, 1], [], []>} : vector<128x32xbf16>, vector<32x16xbf16>, vector<128x16xf32> -> vector<128x16xf32>
      %c0_15 = arith.constant 0 : index
      %c0_16 = arith.constant 0 : index
      %16 = vector.load %arg5[%c0_15, %c0_16] : memref<32x16xbf16, #tpu.memory_space<vmem>>, vector<32x16xbf16>
      %cst_17 = arith.constant dense<0.000000e+00> : vector<128x16xf32>
      %17 = tpu.matmul %13, %16, %cst_17 {dimension_numbers = #tpu.dot_dimension_numbers<[1], [0], [0], [1], [0, 0, 1, 1], [], []>} : vector<128x32xbf16>, vector<32x16xbf16>, vector<128x16xf32> -> vector<128x16xf32>
      %c0_18 = arith.constant 0 : index
      %c0_19 = arith.constant 0 : index
      %18 = vector.load %arg6[%c0_18, %c0_19] : memref<128x16xf32, #tpu.memory_space<vmem>>, vector<128x16xf32>
      %19 = math.exp %17 : vector<128x16xf32>
      %20 = arith.mulf %18, %19 : vector<128x16xf32>
      %21 = arith.addf %20, %15 : vector<128x16xf32>
      %c0_20 = arith.constant 0 : index
      %c0_21 = arith.constant 0 : index
      %22 = vector.load %arg7[%c0_20, %c0_21] : memref<128x16xf32, #tpu.memory_space<vmem>>, vector<128x16xf32>
      tpu.vector_store %arg7[%c0_20, %c0_21], %21 {strides = array<i32>} : memref<128x16xf32, #tpu.memory_space<vmem>>, vector<128x16xf32>,
    } else {
    }
    return
  }
  func.func @transform_0(%arg0: i32, %arg1: i32) -> (i32, i32) {
    %c0_i32 = arith.constant 0 : i32
    return %arg0, %arg1 : i32, i32
  }
  func.func @transform_1(%arg0: i32, %arg1: i32) -> (i32, i32) {
    %c0_i32 = arith.constant 0 : i32
    %c0_i32_0 = arith.constant 0 : i32
    return %arg1, %c0_i32 : i32, i32
  }
  func.func @transform_2(%arg0: i32, %arg1: i32) -> (i32, i32) {
    %c0_i32 = arith.constant 0 : i32
    %c0_i32_0 = arith.constant 0 : i32
    %c0_i32_1 = arith.constant 0 : i32
    return %c0_i32, %c0_i32_0 : i32, i32
  }
  func.func @transform_3(%arg0: i32, %arg1: i32) -> (i32, i32) {
    %c0_i32 = arith.constant 0 : i32
    %c0_i32_0 = arith.constant 0 : i32
    %c0_i32_1 = arith.constant 0 : i32
    return %c0_i32, %c0_i32_0 : i32, i32
  }
  func.func @transform_4(%arg0: i32, %arg1: i32) -> (i32, i32) {
    %c0_i32 = arith.constant 0 : i32
    %c0_i32_0 = arith.constant 0 : i32
    return %arg0, %c0_i32 : i32, i32
  }
  func.func @transform_5(%arg0: i32, %arg1: i32) -> (i32, i32) {
    %c0_i32 = arith.constant 0 : i32
    %c0_i32_0 = arith.constant 0 : i32
    return %arg0, %c0_i32 : i32, i32
  }
}

module attributes {stable_mosaic.version = 11 : i64} {
  func.func @_hidden_kernel(%arg0: i32, %arg1: i32, %arg2: memref<128x128xbf16, #tpu.memory_space<vmem>>, %arg3: memref<128x16xbf16, #tpu.memory_space<vmem>>, %arg4: memref<16x32xbf16, #tpu.memory_space<vmem>>, %arg5: memref<128x32xbf16, #tpu.memory_space<vmem>>, %arg6: memref<128x16xf32, #tpu.memory_space<vmem>>) attributes {dimension_semantics = [#tpu.dimension_semantics<parallel>, #tpu.dimension_semantics<arbitrary>], iteration_bounds = array<i64: 1, 1>, scalar_prefetch = 0 : i64, scratch_operands = 1 : i64, tpu.core_type = #tpu.core_type<tc>, window_params = [{transform_indices = @transform_0, window_bounds = array<i64: 128, 128>}, {transform_indices = @transform_1, window_bounds = array<i64: 128, 16>}, {pipeline_mode = #tpu.pipeline_mode<synchronous>, transform_indices = @transform_2, window_bounds = array<i64: 16, 32>}, {transform_indices = @transform_3, window_bounds = array<i64: 128, 32>}]} {
    %c0_i32 = arith.constant 0 : i32
    %0 = arith.cmpi eq, %arg1, %c0_i32 : i32
    %1 = arith.extui %0 : i1 to i32
    %c0_i32_0 = arith.constant 0 : i32
    %2 = arith.cmpi ne, %1, %c0_i32_0 : i32
    scf.if %2 {
      %cst_10 = arith.constant 0.000000e+00 : f32
      %12 = vector.broadcast %cst_10 : f32 to vector<128x16xf32>
      %c0_11 = arith.constant 0 : index
      %c0_12 = arith.constant 0 : index
      %13 = vector.load %arg6[%c0_11, %c0_12] : memref<128x16xf32, #tpu.memory_space<vmem>>, vector<128x16xf32>
      tpu.vector_store %arg6[%c0_11, %c0_12], %12 {strides = array<i32>} : memref<128x16xf32, #tpu.memory_space<vmem>>, vector<128x16xf32>,
    } else {
    }
    %c0 = arith.constant 0 : index
    %c0_1 = arith.constant 0 : index
    %3 = vector.load %arg6[%c0, %c0_1] : memref<128x16xf32, #tpu.memory_space<vmem>>, vector<128x16xf32>
    %c0_2 = arith.constant 0 : index
    %c0_3 = arith.constant 0 : index
    %4 = vector.load %arg2[%c0_2, %c0_3] : memref<128x128xbf16, #tpu.memory_space<vmem>>, vector<128x128xbf16>
    %c0_4 = arith.constant 0 : index
    %c0_5 = arith.constant 0 : index
    %5 = vector.load %arg3[%c0_4, %c0_5] : memref<128x16xbf16, #tpu.memory_space<vmem>>, vector<128x16xbf16>
    %cst = arith.constant dense<0.000000e+00> : vector<128x16xf32>
    %6 = tpu.matmul %4, %5, %cst {dimension_numbers = #tpu.dot_dimension_numbers<[1], [0], [0], [1], [0, 0, 1, 1], [], []>} : vector<128x128xbf16>, vector<128x16xbf16>, vector<128x16xf32> -> vector<128x16xf32>
    %7 = arith.addf %3, %6 : vector<128x16xf32>
    %c0_6 = arith.constant 0 : index
    %c0_7 = arith.constant 0 : index
    %8 = vector.load %arg6[%c0_6, %c0_7] : memref<128x16xf32, #tpu.memory_space<vmem>>, vector<128x16xf32>
    tpu.vector_store %arg6[%c0_6, %c0_7], %7 {strides = array<i32>} : memref<128x16xf32, #tpu.memory_space<vmem>>, vector<128x16xf32>,
    %c0_i32_8 = arith.constant 0 : i32
    %9 = arith.cmpi eq, %arg1, %c0_i32_8 : i32
    %10 = arith.extui %9 : i1 to i32
    %c0_i32_9 = arith.constant 0 : i32
    %11 = arith.cmpi ne, %10, %c0_i32_9 : i32
    scf.if %11 {
      %c0_10 = arith.constant 0 : index
      %c0_11 = arith.constant 0 : index
      %12 = vector.load %arg6[%c0_10, %c0_11] : memref<128x16xf32, #tpu.memory_space<vmem>>, vector<128x16xf32>
      %13 = arith.truncf %12 : vector<128x16xf32> to vector<128x16xbf16>
      %c0_12 = arith.constant 0 : index
      %c0_13 = arith.constant 0 : index
      %14 = vector.load %arg4[%c0_12, %c0_13] : memref<16x32xbf16, #tpu.memory_space<vmem>>, vector<16x32xbf16>
      %cst_14 = arith.constant dense<0.000000e+00> : vector<128x32xf32>
      %15 = tpu.matmul %13, %14, %cst_14 {dimension_numbers = #tpu.dot_dimension_numbers<[1], [0], [0], [1], [0, 0, 1, 1], [], []>} : vector<128x16xbf16>, vector<16x32xbf16>, vector<128x32xf32> -> vector<128x32xf32>
      %cst_15 = arith.constant 0.000000e+00 : f32
      %16 = vector.broadcast %cst_15 : f32 to vector<128x32xf32>
      %17 = arith.maximumf %15, %16 : vector<128x32xf32>
      %18 = arith.truncf %17 : vector<128x32xf32> to vector<128x32xbf16>
      %c0_16 = arith.constant 0 : index
      %c0_17 = arith.constant 0 : index
      %19 = vector.load %arg5[%c0_16, %c0_17] : memref<128x32xbf16, #tpu.memory_space<vmem>>, vector<128x32xbf16>
      tpu.vector_store %arg5[%c0_16, %c0_17], %18 {strides = array<i32>} : memref<128x32xbf16, #tpu.memory_space<vmem>>, vector<128x32xbf16>,
    } else {
    }
    return
  }
  func.func @transform_0(%arg0: i32, %arg1: i32) -> (i32, i32) {
    %c0_i32 = arith.constant 0 : i32
    return %arg0, %arg1 : i32, i32
  }
  func.func @transform_1(%arg0: i32, %arg1: i32) -> (i32, i32) {
    %c0_i32 = arith.constant 0 : i32
    %c0_i32_0 = arith.constant 0 : i32
    return %arg1, %c0_i32 : i32, i32
  }
  func.func @transform_2(%arg0: i32, %arg1: i32) -> (i32, i32) {
    %c0_i32 = arith.constant 0 : i32
    %c0_i32_0 = arith.constant 0 : i32
    %c0_i32_1 = arith.constant 0 : i32
    return %c0_i32, %c0_i32_0 : i32, i32
  }
  func.func @transform_3(%arg0: i32, %arg1: i32) -> (i32, i32) {
    %c0_i32 = arith.constant 0 : i32
    %c0_i32_0 = arith.constant 0 : i32
    return %arg0, %c0_i32 : i32, i32
  }
}

module attributes {stable_mosaic.version = 11 : i64} {
  func.func @_decode_kernel(%arg0: i32, %arg1: i32, %arg2: memref<128x16xf32, #tpu.memory_space<vmem>>, %arg3: memref<128x16xf32, #tpu.memory_space<vmem>>, %arg4: memref<128x128xbf16, #tpu.memory_space<vmem>>) attributes {dimension_semantics = [#tpu.dimension_semantics<parallel>, #tpu.dimension_semantics<parallel>], iteration_bounds = array<i64: 1, 1>, scalar_prefetch = 0 : i64, scratch_operands = 0 : i64, tpu.core_type = #tpu.core_type<tc>, window_params = [{transform_indices = @transform_0, window_bounds = array<i64: 128, 16>}, {transform_indices = @transform_1, window_bounds = array<i64: 128, 16>}, {transform_indices = @transform_2, window_bounds = array<i64: 128, 128>}]} {
    %c0 = arith.constant 0 : index
    %c0_0 = arith.constant 0 : index
    %0 = vector.load %arg2[%c0, %c0_0] : memref<128x16xf32, #tpu.memory_space<vmem>>, vector<128x16xf32>
    %c0_1 = arith.constant 0 : index
    %c0_2 = arith.constant 0 : index
    %1 = vector.load %arg3[%c0_1, %c0_2] : memref<128x16xf32, #tpu.memory_space<vmem>>, vector<128x16xf32>
    %cst = arith.constant dense<0.000000e+00> : vector<128x128xf32>
    %2 = tpu.matmul %0, %1, %cst {dimension_numbers = #tpu.dot_dimension_numbers<[1], [1], [0], [0], [0, 0, 1, 0], [], []>} : vector<128x16xf32>, vector<128x16xf32>, vector<128x128xf32> -> vector<128x128xf32>
    %3 = arith.negf %2 : vector<128x128xf32>
    %4 = math.exp %3 : vector<128x128xf32>
    %cst_3 = arith.constant 1.000000e+00 : f32
    %5 = vector.broadcast %cst_3 : f32 to vector<128x128xf32>
    %6 = arith.addf %5, %4 : vector<128x128xf32>
    %7 = arith.divf %5, %6 : vector<128x128xf32>
    %8 = arith.truncf %7 : vector<128x128xf32> to vector<128x128xbf16>
    %c0_4 = arith.constant 0 : index
    %c0_5 = arith.constant 0 : index
    %9 = vector.load %arg4[%c0_4, %c0_5] : memref<128x128xbf16, #tpu.memory_space<vmem>>, vector<128x128xbf16>
    tpu.vector_store %arg4[%c0_4, %c0_5], %8 {strides = array<i32>} : memref<128x128xbf16, #tpu.memory_space<vmem>>, vector<128x128xbf16>,
    return
  }
  func.func @transform_0(%arg0: i32, %arg1: i32) -> (i32, i32) {
    %c0_i32 = arith.constant 0 : i32
    %c0_i32_0 = arith.constant 0 : i32
    return %arg0, %c0_i32 : i32, i32
  }
  func.func @transform_1(%arg0: i32, %arg1: i32) -> (i32, i32) {
    %c0_i32 = arith.constant 0 : i32
    %c0_i32_0 = arith.constant 0 : i32
    return %arg1, %c0_i32 : i32, i32
  }
  func.func @transform_2(%arg0: i32, %arg1: i32) -> (i32, i32) {
    %c0_i32 = arith.constant 0 : i32
    return %arg0, %arg1 : i32, i32
  }
}

</mosaic_0001>

<llo_original>
// kernel: vgae_forward.4
$region0: #{vgae_forward.4}
  #allocation0 [shape = 'u32[]', space=smem, size = 0x4, offset = 0x4, fixed_abs, tag = 'smem constant byte address 0x4 - core index']
  #allocation1 [shape = 'u32[72,128]{1,0:T(1,128)}', space=vmem, size = 0x9000, scoped, tag = 'internal scratch']
  #allocation2 [shape = 'f32[128,32]{1,0:T(8,128)}', space=vmem, size = 0x10000, scoped, tag = 'scratch operand']
  %s0 = inlined_call_operand.vmem [shape: bf16[128,128], index: 0, kind: input, shape index: {}]
  %s1 = inlined_call_operand.vmem [shape: bf16[128,32], index: 1, kind: input, shape index: {}]
  %s2 = inlined_call_operand.vmem [shape: bf16[32,16], index: 2, kind: input, shape index: {}]
  %s3 = inlined_call_operand.vmem [shape: bf16[32,16], index: 3, kind: input, shape index: {}]
  %s4 = inlined_call_operand.vmem [shape: f32[128,16], index: 4, kind: input, shape index: {}]
  %s5 = inlined_call_operand.vmem [shape: f32[128,16], index: 5, kind: output, shape index: {}]
  %s6 = sld [smem:[#allocation0]]
  $region38: #{vgae_forward.4} parent=0
    _
  %s8 = ssub.s32 1, %s6
  %s9 = scalar_select 0, %s8, %s6
  // Predicated region
  $region2: #{vgae_forward.4} parent=0 // pred_check
    _
  $region3: #{vgae_forward.4} parent=0 // pred_check_branch
    %11 = sbr.rel (0) target = $region5
  $region4: #{vgae_forward.4} parent=0 // pred_region
    _
  $region5: #{vgae_forward.4} parent=0 // pred_fallthru
    _
  // Predicated region
  $region6: #{vgae_forward.4} parent=0 // pred_check
    _
  $region7: #{vgae_forward.4} parent=0 // pred_check_branch
    %13 = sbr.rel (0) target = $region9
  $region8: #{vgae_forward.4} parent=0 // pred_region
    _
  $region9: #{vgae_forward.4} parent=0 // pred_fallthru
    _
  // Predicated region
  $region10: #{vgae_forward.4} parent=0 // pred_check
    _
  $region11: #{vgae_forward.4} parent=0 // pred_check_branch
    %15 = sbr.rel (0) target = $region13
  $region12: #{vgae_forward.4} parent=0 // pred_region
    _
  $region13: #{vgae_forward.4} parent=0 // pred_fallthru
    _
  // Predicated region
  $region14: #{vgae_forward.4} parent=0 // pred_check
    _
  $region15: #{vgae_forward.4} parent=0 // pred_check_branch
    %17 = sbr.rel (0) target = $region17
  $region16: #{vgae_forward.4} parent=0 // pred_region
    _
  $region17: #{vgae_forward.4} parent=0 // pred_fallthru
    _
  // Predicated region
  $region18: #{vgae_forward.4} parent=0 // pred_check
    _
  $region19: #{vgae_forward.4} parent=0 // pred_check_branch
    %19 = sbr.rel (0) target = $region21
  $region20: #{vgae_forward.4} parent=0 // pred_region
    _
  $region21: #{vgae_forward.4} parent=0 // pred_fallthru
    _
  %p21 = scmp.eq.s32.totalorder 0, 0
  // Predicated region
  $region22: #{vgae_forward.4} parent=0 // pred_check
    %p22 = pneg %p21
  $region23: #{vgae_forward.4} parent=0 // pred_check_branch
    %24 = sbr.rel (%p22) target = $region25
  $region24: #{vgae_forward.4} parent=0 // pred_region
    %vm25 = vcmask 261120
    %26 = vst.msk [vmem:[#allocation2] sm:$0xff] %vm25, 0.0
    %27 = vst.msk [vmem:[#allocation2 + $0x8] sm:$0xff] %vm25, 0.0
    %28 = vst.msk [vmem:[#allocation2 + $0x10] sm:$0xff] %vm25, 0.0
    %29 = vst.msk [vmem:[#allocation2 + $0x18] sm:$0xff] %vm25, 0.0
    %30 = vst.msk [vmem:[#allocation2 + $0x20] sm:$0xff] %vm25, 0.0
    %31 = vst.msk [vmem:[#allocation2 + $0x28] sm:$0xff] %vm25, 0.0
    %32 = vst.msk [vmem:[#allocation2 + $0x30] sm:$0xff] %vm25, 0.0
    %33 = vst.msk [vmem:[#allocation2 + $0x38] sm:$0xff] %vm25, 0.0
    %34 = vst.msk [vmem:[#allocation2 + $0x40] sm:$0xff] %vm25, 0.0
    %35 = vst.msk [vmem:[#allocation2 + $0x48] sm:$0xff] %vm25, 0.0
    %36 = vst.msk [vmem:[#allocation2 + $0x50] sm:$0xff] %vm25, 0.0
    %37 = vst.msk [vmem:[#allocation2 + $0x58] sm:$0xff] %vm25, 0.0
    %38 = vst.msk [vmem:[#allocation2 + $0x60] sm:$0xff] %vm25, 0.0
    %39 = vst.msk [vmem:[#allocation2 + $0x68] sm:$0xff] %vm25, 0.0
    %40 = vst.msk [vmem:[#allocation2 + $0x70] sm:$0xff] %vm25, 0.0
    %41 = vst.msk [vmem:[#allocation2 + $0x78] sm:$0xff] %vm25, 0.0
  $region25: #{vgae_forward.4} parent=0 // pred_fallthru
    _
  %v42 = vld [vmem:[#allocation2] sm:$0xff]
  %v43 = vld [vmem:[#allocation2 + $0x8] sm:$0xff]
  %v44 = vld [vmem:[#allocation2 + $0x10] sm:$0xff]
  %v45 = vld [vmem:[#allocation2 + $0x18] sm:$0xff]
  %v46 = vld [vmem:[#allocation2 + $0x20] sm:$0xff]
  %v47 = vld [vmem:[#allocation2 + $0x28] sm:$0xff]
  %v48 = vld [vmem:[#allocation2 + $0x30] sm:$0xff]
  %v49 = vld [vmem:[#allocation2 + $0x38] sm:$0xff]
  %v50 = vld [vmem:[#allocation2 + $0x40] sm:$0xff]
  %v51 = vld [vmem:[#allocation2 + $0x48] sm:$0xff]
  %v52 = vld [vmem:[#allocation2 + $0x50] sm:$0xff]
  %v53 = vld [vmem:[#allocation2 + $0x58] sm:$0xff]
  %v54 = vld [vmem:[#allocation2 + $0x60] sm:$0xff]
  %v55 = vld [vmem:[#allocation2 + $0x68] sm:$0xff]
  %v56 = vld [vmem:[#allocation2 + $0x70] sm:$0xff]
  %v57 = vld [vmem:[#allocation2 + $0x78] sm:$0xff]
  %v58 = vld [vmem:[%s0] sm:$0xf]
  %v59 = vld [vmem:[%s0 + $0x4] sm:$0xf]
  %v60 = vld [vmem:[%s0 + $0x8] sm:$0xf]
  %v61 = vld [vmem:[%s0 + $0xc] sm:$0xf]
  %v62 = vld [vmem:[%s0 + $0x10] sm:$0xf]
  %v63 = vld [vmem:[%s0 + $0x14] sm:$0xf]
  %v64 = vld [vmem:[%s0 + $0x18] sm:$0xf]
  %v65 = vld [vmem:[%s0 + $0x1c] sm:$0xf]
  %v66 = vld [vmem:[%s0 + $0x20] sm:$0xf]
  %v67 = vld [vmem:[%s0 + $0x24] sm:$0xf]
  %v68 = vld [vmem:[%s0 + $0x28] sm:$0xf]
  %v69 = vld [vmem:[%s0 + $0x2c] sm:$0xf]
  %v70 = vld [vmem:[%s0 + $0x30] sm:$0xf]
  %v71 = vld [vmem:[%s0 + $0x34] sm:$0xf]
  %v72 = vld [vmem:[%s0 + $0x38] sm:$0xf]
  %v73 = vld [vmem:[%s0 + $0x3c] sm:$0xf]
  %v74 = vld [vmem:[%s1] sm:$0xf]
  %v75 = vld [vmem:[%s1 + $0x4] sm:$0xf]
  %v76 = vld [vmem:[%s1 + $0x8] sm:$0xf]
  %v77 = vld [vmem:[%s1 + $0xc] sm:$0xf]
  %v78 = vld [vmem:[%s1 + $0x10] sm:$0xf]
  %v79 = vld [vmem:[%s1 + $0x14] sm:$0xf]
  %v80 = vld [vmem:[%s1 + $0x18] sm:$0xf]
  %v81 = vld [vmem:[%s1 + $0x1c] sm:$0xf]
  %v82 = vld [vmem:[%s1 + $0x20] sm:$0xf]
  %v83 = vld [vmem:[%s1 + $0x24] sm:$0xf]
  %v84 = vld [vmem:[%s1 + $0x28] sm:$0xf]
  %v85 = vld [vmem:[%s1 + $0x2c] sm:$0xf]
  %v86 = vld [vmem:[%s1 + $0x30] sm:$0xf]
  %v87 = vld [vmem:[%s1 + $0x34] sm:$0xf]
  %v88 = vld [vmem:[%s1 + $0x38] sm:$0xf]
  %v89 = vld [vmem:[%s1 + $0x3c] sm:$0xf]
  %v106 = vunpack.c.l.b16 %v58
  %v107 = vunpack.c.l.b16 %v59
  %v108 = vunpack.c.l.b16 %v60
  %v109 = vunpack.c.l.b16 %v61
  %v110 = vunpack.c.l.b16 %v62
  %v111 = vunpack.c.l.b16 %v63
  %v112 = vunpack.c.l.b16 %v64
  %v113 = vunpack.c.l.b16 %v65
  %v114 = vunpack.c.l.b16 %v66
  %v115 = vunpack.c.l.b16 %v67
  %v116 = vunpack.c.l.b16 %v68
  %v117 = vunpack.c.l.b16 %v69
  %v118 = vunpack.c.l.b16 %v70
  %v119 = vunpack.c.l.b16 %v71
  %v120 = vunpack.c.l.b16 %v72
  %v121 = vunpack.c.l.b16 %v73
  %v122 = vpack.c.b16 %v107, %v106
  %v123 = vpack.c.b16 %v109, %v108
  %v124 = vpack.c.b16 %v111, %v110
  %v125 = vpack.c.b16 %v113, %v112
  %v126 = vpack.c.b16 %v115, %v114
  %v127 = vpack.c.b16 %v117, %v116
  %v128 = vpack.c.b16 %v119, %v118
  %v129 = vpack.c.b16 %v121, %v120
  %v154 = vunpack.c.l.b16 %v74
  %v155 = vunpack.c.l.b16 %v75
  %v156 = vunpack.c.l.b16 %v76
  %v157 = vunpack.c.l.b16 %v77
  %v158 = vunpack.c.l.b16 %v78
  %v159 = vunpack.c.l.b16 %v79
  %v160 = vunpack.c.l.b16 %v80
  %v161 = vunpack.c.l.b16 %v81
  %v162 = vunpack.c.l.b16 %v82
  %v163 = vunpack.c.l.b16 %v83
  %v164 = vunpack.c.l.b16 %v84
  %v165 = vunpack.c.l.b16 %v85
  %v166 = vunpack.c.l.b16 %v86
  %v167 = vunpack.c.l.b16 %v87
  %v168 = vunpack.c.l.b16 %v88
  %v169 = vunpack.c.l.b16 %v89
  %v170 = vpack.c.b16 %v155, %v154
  %v171 = vpack.c.b16 %v157, %v156
  %v172 = vpack.c.b16 %v159, %v158
  %v173 = vpack.c.b16 %v161, %v160
  %v174 = vpack.c.b16 %v163, %v162
  %v175 = vpack.c.b16 %v165, %v164
  %v176 = vpack.c.b16 %v167, %v166
  %v177 = vpack.c.b16 %v169, %v168
  %186 = vmatpush.bf16.msra.mxu0 %v177
  %187 = vmatpush.bf16.msra.mxu0 %v176
  %188 = vmatpush.bf16.msra.mxu0 %v175
  %189 = vmatpush.bf16.msra.mxu0 %v174
  %190 = vmatpush.bf16.msra.mxu0 %v173
  %191 = vmatpush.bf16.msra.mxu0 %v172
  %192 = vmatpush.bf16.msra.mxu0 %v171
  %193 = vmatpush.bf16.msra.mxu0 %v170
  %194 = vmatmul.bf16.gmra.mxu0 %v122
  %v195 = vpop.f32.mrf.mxu0
  %v196 = vadd.f32 0.0, %v195
  %v197 = vpop.f32.mrf.mxu0
  %v198 = vadd.f32 0.0, %v197
  %199 = vmatmul.bf16.gmra.mxu0 %v123
  %v200 = vpop.f32.mrf.mxu0
  %v201 = vadd.f32 0.0, %v200
  %v202 = vpop.f32.mrf.mxu0
  %v203 = vadd.f32 0.0, %v202
  %204 = vmatmul.bf16.gmra.mxu0 %v124
  %v205 = vpop.f32.mrf.mxu0
  %v206 = vadd.f32 0.0, %v205
  %v207 = vpop.f32.mrf.mxu0
  %v208 = vadd.f32 0.0, %v207
  %209 = vmatmul.bf16.gmra.mxu0 %v125
  %v210 = vpop.f32.mrf.mxu0
  %v211 = vadd.f32 0.0, %v210
  %v212 = vpop.f32.mrf.mxu0
  %v213 = vadd.f32 0.0, %v212
  %214 = vmatmul.bf16.gmra.mxu0 %v126
  %v215 = vpop.f32.mrf.mxu0
  %v216 = vadd.f32 0.0, %v215
  %v217 = vpop.f32.mrf.mxu0
  %v218 = vadd.f32 0.0, %v217
  %219 = vmatmul.bf16.gmra.mxu0 %v127
  %v220 = vpop.f32.mrf.mxu0
  %v221 = vadd.f32 0.0, %v220
  %v222 = vpop.f32.mrf.mxu0
  %v223 = vadd.f32 0.0, %v222
  %224 = vmatmul.bf16.gmra.mxu0 %v128
  %v225 = vpop.f32.mrf.mxu0
  %v226 = vadd.f32 0.0, %v225
  %v227 = vpop.f32.mrf.mxu0
  %v228 = vadd.f32 0.0, %v227
  %229 = vmatmul.bf16.gmra.mxu0 %v129
  %v230 = vpop.f32.mrf.mxu0
  %v231 = vadd.f32 0.0, %v230
  %v232 = vpop.f32.mrf.mxu0
  %v233 = vadd.f32 0.0, %v232
  %234 = vdwg.mxu0
  %v235 = vadd.f32 %v42, %v196
  %v236 = vadd.f32 %v43, %v198
  %v237 = vadd.f32 %v44, %v201
  %v238 = vadd.f32 %v45, %v203
  %v239 = vadd.f32 %v46, %v206
  %v240 = vadd.f32 %v47, %v208
  %v241 = vadd.f32 %v48, %v211
  %v242 = vadd.f32 %v49, %v213
  %v243 = vadd.f32 %v50, %v216
  %v244 = vadd.f32 %v51, %v218
  %v245 = vadd.f32 %v52, %v221
  %v246 = vadd.f32 %v53, %v223
  %v247 = vadd.f32 %v54, %v226
  %v248 = vadd.f32 %v55, %v228
  %v249 = vadd.f32 %v56, %v231
  %v250 = vadd.f32 %v57, %v233
  %vm251 = vcmask 261120
  %252 = vst.msk [vmem:[#allocation2] sm:$0xff] %vm251, %v235
  %253 = vst.msk [vmem:[#allocation2 + $0x8] sm:$0xff] %vm251, %v236
  %254 = vst.msk [vmem:[#allocation2 + $0x10] sm:$0xff] %vm251, %v237
  %255 = vst.msk [vmem:[#allocation2 + $0x18] sm:$0xff] %vm251, %v238
  %256 = vst.msk [vmem:[#allocation2 + $0x20] sm:$0xff] %vm251, %v239
  %257 = vst.msk [vmem:[#allocation2 + $0x28] sm:$0xff] %vm251, %v240
  %258 = vst.msk [vmem:[#allocation2 + $0x30] sm:$0xff] %vm251, %v241
  %259 = vst.msk [vmem:[#allocation2 + $0x38] sm:$0xff] %vm251, %v242
  %260 = vst.msk [vmem:[#allocation2 + $0x40] sm:$0xff] %vm251, %v243
  %261 = vst.msk [vmem:[#allocation2 + $0x48] sm:$0xff] %vm251, %v244
  %262 = vst.msk [vmem:[#allocation2 + $0x50] sm:$0xff] %vm251, %v245
  %263 = vst.msk [vmem:[#allocation2 + $0x58] sm:$0xff] %vm251, %v246
  %264 = vst.msk [vmem:[#allocation2 + $0x60] sm:$0xff] %vm251, %v247
  %265 = vst.msk [vmem:[#allocation2 + $0x68] sm:$0xff] %vm251, %v248
  %266 = vst.msk [vmem:[#allocation2 + $0x70] sm:$0xff] %vm251, %v249
  %267 = vst.msk [vmem:[#allocation2 + $0x78] sm:$0xff] %vm251, %v250
  // Predicated region
  $region26: #{vgae_forward.4} parent=0 // pred_check
    %p268 = pneg %p21
  $region27: #{vgae_forward.4} parent=0 // pred_check_branch
    %270 = sbr.rel (%p268) target = $region29
  $region28: #{vgae_forward.4} parent=0 // pred_region
    %v271 = vld [vmem:[#allocation2] sm:$0xff]
    %v272 = vld [vmem:[#allocation2 + $0x8] sm:$0xff]
    %v273 = vld [vmem:[#allocation2 + $0x10] sm:$0xff]
    %v274 = vld [vmem:[#allocation2 + $0x18] sm:$0xff]
    %v275 = vld [vmem:[#allocation2 + $0x20] sm:$0xff]
    %v276 = vld [vmem:[#allocation2 + $0x28] sm:$0xff]
    %v277 = vld [vmem:[#allocation2 + $0x30] sm:$0xff]
    %v278 = vld [vmem:[#allocation2 + $0x38] sm:$0xff]
    %v279 = vld [vmem:[#allocation2 + $0x40] sm:$0xff]
    %v280 = vld [vmem:[#allocation2 + $0x48] sm:$0xff]
    %v281 = vld [vmem:[#allocation2 + $0x50] sm:$0xff]
    %v282 = vld [vmem:[#allocation2 + $0x58] sm:$0xff]
    %v283 = vld [vmem:[#allocation2 + $0x60] sm:$0xff]
    %v284 = vld [vmem:[#allocation2 + $0x68] sm:$0xff]
    %v285 = vld [vmem:[#allocation2 + $0x70] sm:$0xff]
    %v286 = vld [vmem:[#allocation2 + $0x78] sm:$0xff]
    %v287 = vpack.c.bf16 %v272, %v271
    %v288 = vpack.c.bf16 %v274, %v273
    %v289 = vpack.c.bf16 %v276, %v275
    %v290 = vpack.c.bf16 %v278, %v277
    %v291 = vpack.c.bf16 %v280, %v279
    %v292 = vpack.c.bf16 %v282, %v281
    %v293 = vpack.c.bf16 %v284, %v283
    %v294 = vpack.c.bf16 %v286, %v285
    %v295 = vld [vmem:[%s2] sm:$0xf]
    %v296 = vld [vmem:[%s2 + $0x4] sm:$0xf]
    %v297 = vld [vmem:[%s2 + $0x8] sm:$0xf]
    %v298 = vld [vmem:[%s2 + $0xc] sm:$0xf]
    %v303 = vunpack.c.l.b16 %v295
    %v304 = vunpack.c.l.b16 %v296
    %v305 = vunpack.c.l.b16 %v297
    %v306 = vunpack.c.l.b16 %v298
    %v307 = vpack.c.b16 %v304, %v303
    %v308 = vpack.c.b16 %v306, %v305
    %v312 = vsel %vm251, %v287, 0
    %v315 = vsel %vm251, %v288, 0
    %v318 = vsel %vm251, %v289, 0
    %v321 = vsel %vm251, %v290, 0
    %v324 = vsel %vm251, %v291, 0
    %v327 = vsel %vm251, %v292, 0
    %v330 = vsel %vm251, %v293, 0
    %v333 = vsel %vm251, %v294, 0
    %335 = vmatpush.bf16.msra.mxu0 0
    %336 = vmatpush.bf16.msra.mxu0 0
    %337 = vmatpush.bf16.msra.mxu0 0
    %338 = vmatpush.bf16.msra.mxu0 0
    %339 = vmatpush.bf16.msra.mxu0 0
    %340 = vmatpush.bf16.msra.mxu0 0
    %341 = vmatpush.bf16.msra.mxu0 %v308
    %342 = vmatpush.bf16.msra.mxu0 %v307
    %343 = vmatmul.bf16.gmra.mxu0 %v312
    %v344 = vpop.f32.mrf.mxu0
    %v345 = vadd.f32 0.0, %v344
    %v346 = vpop.f32.mrf.mxu0
    %v347 = vadd.f32 0.0, %v346
    %348 = vmatmul.bf16.gmra.mxu0 %v315
    %v349 = vpop.f32.mrf.mxu0
    %v350 = vadd.f32 0.0, %v349
    %v351 = vpop.f32.mrf.mxu0
    %v352 = vadd.f32 0.0, %v351
    %353 = vmatmul.bf16.gmra.mxu0 %v318
    %v354 = vpop.f32.mrf.mxu0
    %v355 = vadd.f32 0.0, %v354
    %v356 = vpop.f32.mrf.mxu0
    %v357 = vadd.f32 0.0, %v356
    %358 = vmatmul.bf16.gmra.mxu0 %v321
    %v359 = vpop.f32.mrf.mxu0
    %v360 = vadd.f32 0.0, %v359
    %v361 = vpop.f32.mrf.mxu0
    %v362 = vadd.f32 0.0, %v361
    %363 = vmatmul.bf16.gmra.mxu0 %v324
    %v364 = vpop.f32.mrf.mxu0
    %v365 = vadd.f32 0.0, %v364
    %v366 = vpop.f32.mrf.mxu0
    %v367 = vadd.f32 0.0, %v366
    %368 = vmatmul.bf16.gmra.mxu0 %v327
    %v369 = vpop.f32.mrf.mxu0
    %v370 = vadd.f32 0.0, %v369
    %v371 = vpop.f32.mrf.mxu0
    %v372 = vadd.f32 0.0, %v371
    %373 = vmatmul.bf16.gmra.mxu0 %v330
    %v374 = vpop.f32.mrf.mxu0
    %v375 = vadd.f32 0.0, %v374
    %v376 = vpop.f32.mrf.mxu0
    %v377 = vadd.f32 0.0, %v376
    %378 = vmatmul.bf16.gmra.mxu0 %v333
    %v379 = vpop.f32.mrf.mxu0
    %v380 = vadd.f32 0.0, %v379
    %v381 = vpop.f32.mrf.mxu0
    %v382 = vadd.f32 0.0, %v381
    %383 = vdwg.mxu0
    %v384 = vld [vmem:[%s3] sm:$0xf]
    %v385 = vld [vmem:[%s3 + $0x4] sm:$0xf]
    %v386 = vld [vmem:[%s3 + $0x8] sm:$0xf]
    %v387 = vld [vmem:[%s3 + $0xc] sm:$0xf]
    %v392 = vunpack.c.l.b16 %v384
    %v393 = vunpack.c.l.b16 %v385
    %v394 = vunpack.c.l.b16 %v386
    %v395 = vunpack.c.l.b16 %v387
    %v396 = vpack.c.b16 %v393, %v392
    %v397 = vpack.c.b16 %v395, %v394
    %400 = vmatpush.bf16.msra.mxu0 0
    %401 = vmatpush.bf16.msra.mxu0 0
    %402 = vmatpush.bf16.msra.mxu0 0
    %403 = vmatpush.bf16.msra.mxu0 0
    %404 = vmatpush.bf16.msra.mxu0 0
    %405 = vmatpush.bf16.msra.mxu0 0
    %406 = vmatpush.bf16.msra.mxu0 %v397
    %407 = vmatpush.bf16.msra.mxu0 %v396
    %408 = vmatmul.bf16.gmra.mxu0 %v312
    %v409 = vpop.f32.mrf.mxu0
    %v410 = vadd.f32 0.0, %v409
    %v411 = vpop.f32.mrf.mxu0
    %v412 = vadd.f32 0.0, %v411
    %413 = vmatmul.bf16.gmra.mxu0 %v315
    %v414 = vpop.f32.mrf.mxu0
    %v415 = vadd.f32 0.0, %v414
    %v416 = vpop.f32.mrf.mxu0
    %v417 = vadd.f32 0.0, %v416
    %418 = vmatmul.bf16.gmra.mxu0 %v318
    %v419 = vpop.f32.mrf.mxu0
    %v420 = vadd.f32 0.0, %v419
    %v421 = vpop.f32.mrf.mxu0
    %v422 = vadd.f32 0.0, %v421
    %423 = vmatmul.bf16.gmra.mxu0 %v321
    %v424 = vpop.f32.mrf.mxu0
    %v425 = vadd.f32 0.0, %v424
    %v426 = vpop.f32.mrf.mxu0
    %v427 = vadd.f32 0.0, %v426
    %428 = vmatmul.bf16.gmra.mxu0 %v324
    %v429 = vpop.f32.mrf.mxu0
    %v430 = vadd.f32 0.0, %v429
    %v431 = vpop.f32.mrf.mxu0
    %v432 = vadd.f32 0.0, %v431
    %433 = vmatmul.bf16.gmra.mxu0 %v327
    %v434 = vpop.f32.mrf.mxu0
    %v435 = vadd.f32 0.0, %v434
    %v436 = vpop.f32.mrf.mxu0
    %v437 = vadd.f32 0.0, %v436
    %438 = vmatmul.bf16.gmra.mxu0 %v330
    %v439 = vpop.f32.mrf.mxu0
    %v440 = vadd.f32 0.0, %v439
    %v441 = vpop.f32.mrf.mxu0
    %v442 = vadd.f32 0.0, %v441
    %443 = vmatmul.bf16.gmra.mxu0 %v333
    %v444 = vpop.f32.mrf.mxu0
    %v445 = vadd.f32 0.0, %v444
    %v446 = vpop.f32.mrf.mxu0
    %v447 = vadd.f32 0.0, %v446
    %448 = vdwg.mxu0
    %v449 = vld [vmem:[%s4] sm:$0xff]
    %v450 = vld [vmem:[%s4 + $0x8] sm:$0xff]
    %v451 = vld [vmem:[%s4 + $0x10] sm:$0xff]
    %v452 = vld [vmem:[%s4 + $0x18] sm:$0xff]
    %v453 = vld [vmem:[%s4 + $0x20] sm:$0xff]
    %v454 = vld [vmem:[%s4 + $0x28] sm:$0xff]
    %v455 = vld [vmem:[%s4 + $0x30] sm:$0xff]
    %v456 = vld [vmem:[%s4 + $0x38] sm:$0xff]
    %v457 = vld [vmem:[%s4 + $0x40] sm:$0xff]
    %v458 = vld [vmem:[%s4 + $0x48] sm:$0xff]
    %v459 = vld [vmem:[%s4 + $0x50] sm:$0xff]
    %v460 = vld [vmem:[%s4 + $0x58] sm:$0xff]
    %v461 = vld [vmem:[%s4 + $0x60] sm:$0xff]
    %v462 = vld [vmem:[%s4 + $0x68] sm:$0xff]
    %v463 = vld [vmem:[%s4 + $0x70] sm:$0xff]
    %v464 = vld [vmem:[%s4 + $0x78] sm:$0xff]
    %v465 = vmul.f32 %v410, 1.442695
    %v466 = vpow.pop %v465
    %v467 = vmul.f32 %v412, 1.442695
    %v468 = vpow.pop %v467
    %v469 = vmul.f32 %v415, 1.442695
    %v470 = vpow.pop %v469
    %v471 = vmul.f32 %v417, 1.442695
    %v472 = vpow.pop %v471
    %v473 = vmul.f32 %v420, 1.442695
    %v474 = vpow.pop %v473
    %v475 = vmul.f32 %v422, 1.442695
    %v476 = vpow.pop %v475
    %v477 = vmul.f32 %v425, 1.442695
    %v478 = vpow.pop %v477
    %v479 = vmul.f32 %v427, 1.442695
    %v480 = vpow.pop %v479
    %v481 = vmul.f32 %v430, 1.442695
    %v482 = vpow.pop %v481
    %v483 = vmul.f32 %v432, 1.442695
    %v484 = vpow.pop %v483
    %v485 = vmul.f32 %v435, 1.442695
    %v486 = vpow.pop %v485
    %v487 = vmul.f32 %v437, 1.442695
    %v488 = vpow.pop %v487
    %v489 = vmul.f32 %v440, 1.442695
    %v490 = vpow.pop %v489
    %v491 = vmul.f32 %v442, 1.442695
    %v492 = vpow.pop %v491
    %v493 = vmul.f32 %v445, 1.442695
    %v494 = vpow.pop %v493
    %v495 = vmul.f32 %v447, 1.442695
    %v496 = vpow.pop %v495
    %v497 = vmul.f32 %v449, %v466
    %v498 = vmul.f32 %v450, %v468
    %v499 = vmul.f32 %v451, %v470
    %v500 = vmul.f32 %v452, %v472
    %v501 = vmul.f32 %v453, %v474
    %v502 = vmul.f32 %v454, %v476
    %v503 = vmul.f32 %v455, %v478
    %v504 = vmul.f32 %v456, %v480
    %v505 = vmul.f32 %v457, %v482
    %v506 = vmul.f32 %v458, %v484
    %v507 = vmul.f32 %v459, %v486
    %v508 = vmul.f32 %v460, %v488
    %v509 = vmul.f32 %v461, %v490
    %v510 = vmul.f32 %v462, %v492
    %v511 = vmul.f32 %v463, %v494
    %v512 = vmul.f32 %v464, %v496
    %v513 = vadd.f32 %v497, %v345
    %v514 = vadd.f32 %v498, %v347
    %v515 = vadd.f32 %v499, %v350
    %v516 = vadd.f32 %v500, %v352
    %v517 = vadd.f32 %v501, %v355
    %v518 = vadd.f32 %v502, %v357
    %v519 = vadd.f32 %v503, %v360
    %v520 = vadd.f32 %v504, %v362
    %v521 = vadd.f32 %v505, %v365
    %v522 = vadd.f32 %v506, %v367
    %v523 = vadd.f32 %v507, %v370
    %v524 = vadd.f32 %v508, %v372
    %v525 = vadd.f32 %v509, %v375
    %v526 = vadd.f32 %v510, %v377
    %v527 = vadd.f32 %v511, %v380
    %v528 = vadd.f32 %v512, %v382
    %vm529 = vcmask 130048
    %530 = vst.msk [vmem:[%s5] sm:$0xff] %vm529, %v513
    %531 = vst.msk [vmem:[%s5 + $0x8] sm:$0xff] %vm529, %v514
    %532 = vst.msk [vmem:[%s5 + $0x10] sm:$0xff] %vm529, %v515
    %533 = vst.msk [vmem:[%s5 + $0x18] sm:$0xff] %vm529, %v516
    %534 = vst.msk [vmem:[%s5 + $0x20] sm:$0xff] %vm529, %v517
    %535 = vst.msk [vmem:[%s5 + $0x28] sm:$0xff] %vm529, %v518
    %536 = vst.msk [vmem:[%s5 + $0x30] sm:$0xff] %vm529, %v519
    %537 = vst.msk [vmem:[%s5 + $0x38] sm:$0xff] %vm529, %v520
    %538 = vst.msk [vmem:[%s5 + $0x40] sm:$0xff] %vm529, %v521
    %539 = vst.msk [vmem:[%s5 + $0x48] sm:$0xff] %vm529, %v522
    %540 = vst.msk [vmem:[%s5 + $0x50] sm:$0xff] %vm529, %v523
    %541 = vst.msk [vmem:[%s5 + $0x58] sm:$0xff] %vm529, %v524
    %542 = vst.msk [vmem:[%s5 + $0x60] sm:$0xff] %vm529, %v525
    %543 = vst.msk [vmem:[%s5 + $0x68] sm:$0xff] %vm529, %v526
    %544 = vst.msk [vmem:[%s5 + $0x70] sm:$0xff] %vm529, %v527
    %545 = vst.msk [vmem:[%s5 + $0x78] sm:$0xff] %vm529, %v528
  $region29: #{vgae_forward.4} parent=0 // pred_fallthru
    _
  // Predicated region
  $region30: #{vgae_forward.4} parent=0 // pred_check
    _
  $region31: #{vgae_forward.4} parent=0 // pred_check_branch
    %547 = sbr.rel (0) target = $region33
  $region32: #{vgae_forward.4} parent=0 // pred_region
    _
  $region33: #{vgae_forward.4} parent=0 // pred_fallthru
    _
  // Predicated region
  $region34: #{vgae_forward.4} parent=0 // pred_check
    _
  $region35: #{vgae_forward.4} parent=0 // pred_check_branch
    %549 = sbr.rel (0) target = $region37
  $region36: #{vgae_forward.4} parent=0 // pred_region
    _
  $region37: #{vgae_forward.4} parent=0 // pred_fallthru
    _

// kernel: vgae_forward.5
$region0: #{vgae_forward.5}
  #allocation0 [shape = 'u32[]', space=smem, size = 0x4, offset = 0x4, fixed_abs, tag = 'smem constant byte address 0x4 - core index']
  #allocation1 [shape = 'u32[72,128]{1,0:T(1,128)}', space=vmem, size = 0x9000, scoped, tag = 'internal scratch']
  %s0 = inlined_call_operand.vmem [shape: f32[128,16], index: 0, kind: input, shape index: {}, may-alias: {0,1}]
  %s1 = inlined_call_operand.vmem [shape: f32[128,16], index: 1, kind: input, shape index: {}, may-alias: {0,1}]
  %s2 = inlined_call_operand.hbm [shape: bf16[128,128], index: 2, kind: output, shape index: {}]
  %s3 = sld [smem:[#allocation0]]
  $region18: #{vgae_forward.5} parent=0
    _
  %s5 = ssub.s32 1, %s3
  %s6 = scalar_select 0, %s5, %s3
  $region1: #{vgae_forward.5} parent=0
    #allocation2 [shape = 'u8[32768]{0}', space=vmem, size = 0x8000, scoped, tag = 'output window, operand 0, single buffered']
    #allocation3 [shape = 's32[1]{0}', space=sflag, size = 0x4, scoped, tag = 'scoped memory for vgae_forward.5']
    %7 = vsyncpa [#allocation3], 0
    // Predicated region
    $region2: #{vgae_forward.5} parent=1 // pred_check
      _
    $region3: #{vgae_forward.5} parent=1 // pred_check_branch
      %9 = sbr.rel (0) target = $region5
    $region4: #{vgae_forward.5} parent=1 // pred_region
      _
    $region5: #{vgae_forward.5} parent=1 // pred_fallthru
      _
    // Predicated region
    $region6: #{vgae_forward.5} parent=1 // pred_check
      _
    $region7: #{vgae_forward.5} parent=1 // pred_check_branch
      %11 = sbr.rel (0) target = $region9
    $region8: #{vgae_forward.5} parent=1 // pred_region
      _
    $region9: #{vgae_forward.5} parent=1 // pred_fallthru
      _
    %v12 = vld [vmem:[%s0] sm:$0xff]
    %v13 = vld [vmem:[%s0 + $0x8] sm:$0xff]
    %v14 = vld [vmem:[%s0 + $0x10] sm:$0xff]
    %v15 = vld [vmem:[%s0 + $0x18] sm:$0xff]
    %v16 = vld [vmem:[%s0 + $0x20] sm:$0xff]
    %v17 = vld [vmem:[%s0 + $0x28] sm:$0xff]
    %v18 = vld [vmem:[%s0 + $0x30] sm:$0xff]
    %v19 = vld [vmem:[%s0 + $0x38] sm:$0xff]
    %v20 = vld [vmem:[%s0 + $0x40] sm:$0xff]
    %v21 = vld [vmem:[%s0 + $0x48] sm:$0xff]
    %v22 = vld [vmem:[%s0 + $0x50] sm:$0xff]
    %v23 = vld [vmem:[%s0 + $0x58] sm:$0xff]
    %v24 = vld [vmem:[%s0 + $0x60] sm:$0xff]
    %v25 = vld [vmem:[%s0 + $0x68] sm:$0xff]
    %v26 = vld [vmem:[%s0 + $0x70] sm:$0xff]
    %v27 = vld [vmem:[%s0 + $0x78] sm:$0xff]
    %v28 = vld [vmem:[%s1] sm:$0xff]
    %v29 = vld [vmem:[%s1 + $0x8] sm:$0xff]
    %v30 = vld [vmem:[%s1 + $0x10] sm:$0xff]
    %v31 = vld [vmem:[%s1 + $0x18] sm:$0xff]
    %v32 = vld [vmem:[%s1 + $0x20] sm:$0xff]
    %v33 = vld [vmem:[%s1 + $0x28] sm:$0xff]
    %v34 = vld [vmem:[%s1 + $0x30] sm:$0xff]
    %v35 = vld [vmem:[%s1 + $0x38] sm:$0xff]
    %v36 = vld [vmem:[%s1 + $0x40] sm:$0xff]
    %v37 = vld [vmem:[%s1 + $0x48] sm:$0xff]
    %v38 = vld [vmem:[%s1 + $0x50] sm:$0xff]
    %v39 = vld [vmem:[%s1 + $0x58] sm:$0xff]
    %v40 = vld [vmem:[%s1 + $0x60] sm:$0xff]
    %v41 = vld [vmem:[%s1 + $0x68] sm:$0xff]
    %v42 = vld [vmem:[%s1 + $0x70] sm:$0xff]
    %v43 = vld [vmem:[%s1 + $0x78] sm:$0xff]
    %vm44 = vcmask 130048
    %v46 = vsel %vm44, %v12, 0
    %v49 = vsel %vm44, %v13, 0
    %v52 = vsel %vm44, %v14, 0
    %v55 = vsel %vm44, %v15, 0
    %v58 = vsel %vm44, %v16, 0
    %v61 = vsel %vm44, %v17, 0
    %v64 = vsel %vm44, %v18, 0
    %v67 = vsel %vm44, %v19, 0
    %v70 = vsel %vm44, %v20, 0
    %v73 = vsel %vm44, %v21, 0
    %v76 = vsel %vm44, %v22, 0
    %v79 = vsel %vm44, %v23, 0
    %v82 = vsel %vm44, %v24, 0
    %v85 = vsel %vm44, %v25, 0
    %v88 = vsel %vm44, %v26, 0
    %v91 = vsel %vm44, %v27, 0
    %v94 = vsel %vm44, %v28, 0
    %v97 = vsel %vm44, %v29, 0
    %v100 = vsel %vm44, %v30, 0
    %v103 = vsel %vm44, %v31, 0
    %v106 = vsel %vm44, %v32, 0
    %v109 = vsel %vm44, %v33, 0
    %v112 = vsel %vm44, %v34, 0
    %v115 = vsel %vm44, %v35, 0
    %v118 = vsel %vm44, %v36, 0
    %v121 = vsel %vm44, %v37, 0
    %v124 = vsel %vm44, %v38, 0
    %v127 = vsel %vm44, %v39, 0
    %v130 = vsel %vm44, %v40, 0
    %v133 = vsel %vm44, %v41, 0
    %v136 = vsel %vm44, %v42, 0
    %v139 = vsel %vm44, %v43, 0
    %141 = vmatpush.xpose.msra.mxu0 %v139
    %142 = vmatpush.xpose.msra.mxu0 %v136
    %143 = vmatpush.xpose.msra.mxu0 %v133
    %144 = vmatpush.xpose.msra.mxu0 %v130
    %145 = vmatpush.xpose.msra.mxu0 %v127
    %146 = vmatpush.xpose.msra.mxu0 %v124
    %147 = vmatpush.xpose.msra.mxu0 %v121
    %148 = vmatpush.xpose.msra.mxu0 %v118
    %149 = vmatpush.xpose.msra.mxu0 %v115
    %150 = vmatpush.xpose.msra.mxu0 %v112
    %151 = vmatpush.xpose.msra.mxu0 %v109
    %152 = vmatpush.xpose.msra.mxu0 %v106
    %153 = vmatpush.xpose.msra.mxu0 %v103
    %154 = vmatpush.xpose.msra.mxu0 %v100
    %155 = vmatpush.xpose.msra.mxu0 %v97
    %156 = vmatpush.xpose.msra.mxu0 %v94
    %157 = vmatmul.f32.gmra.mxu0 %v46
    %v158 = vpop.f32.mrf.mxu0
    %v159 = vadd.f32 0.0, %v158
    %160 = vmatmul.f32.gmra.mxu0 %v49
    %v161 = vpop.f32.mrf.mxu0
    %v162 = vadd.f32 0.0, %v161
    %163 = vmatmul.f32.gmra.mxu0 %v52
    %v164 = vpop.f32.mrf.mxu0
    %v165 = vadd.f32 0.0, %v164
    %166 = vmatmul.f32.gmra.mxu0 %v55
    %v167 = vpop.f32.mrf.mxu0
    %v168 = vadd.f32 0.0, %v167
    %169 = vmatmul.f32.gmra.mxu0 %v58
    %v170 = vpop.f32.mrf.mxu0
    %v171 = vadd.f32 0.0, %v170
    %172 = vmatmul.f32.gmra.mxu0 %v61
    %v173 = vpop.f32.mrf.mxu0
    %v174 = vadd.f32 0.0, %v173
    %175 = vmatmul.f32.gmra.mxu0 %v64
    %v176 = vpop.f32.mrf.mxu0
    %v177 = vadd.f32 0.0, %v176
    %178 = vmatmul.f32.gmra.mxu0 %v67
    %v179 = vpop.f32.mrf.mxu0
    %v180 = vadd.f32 0.0, %v179
    %181 = vmatmul.f32.gmra.mxu0 %v70
    %v182 = vpop.f32.mrf.mxu0
    %v183 = vadd.f32 0.0, %v182
    %184 = vmatmul.f32.gmra.mxu0 %v73
    %v185 = vpop.f32.mrf.mxu0
    %v186 = vadd.f32 0.0, %v185
    %187 = vmatmul.f32.gmra.mxu0 %v76
    %v188 = vpop.f32.mrf.mxu0
    %v189 = vadd.f32 0.0, %v188
    %190 = vmatmul.f32.gmra.mxu0 %v79
    %v191 = vpop.f32.mrf.mxu0
    %v192 = vadd.f32 0.0, %v191
    %193 = vmatmul.f32.gmra.mxu0 %v82
    %v194 = vpop.f32.mrf.mxu0
    %v195 = vadd.f32 0.0, %v194
    %196 = vmatmul.f32.gmra.mxu0 %v85
    %v197 = vpop.f32.mrf.mxu0
    %v198 = vadd.f32 0.0, %v197
    %199 = vmatmul.f32.gmra.mxu0 %v88
    %v200 = vpop.f32.mrf.mxu0
    %v201 = vadd.f32 0.0, %v200
    %202 = vmatmul.f32.gmra.mxu0 %v91
    %v203 = vpop.f32.mrf.mxu0
    %v204 = vadd.f32 0.0, %v203
    %205 = vdwg.mxu0
    %v206 = vxor.u32 %v159, 2147483648
    %v207 = vxor.u32 %v162, 2147483648
    %v208 = vxor.u32 %v165, 2147483648
    %v209 = vxor.u32 %v168, 2147483648
    %v210 = vxor.u32 %v171, 2147483648
    %v211 = vxor.u32 %v174, 2147483648
    %v212 = vxor.u32 %v177, 2147483648
    %v213 = vxor.u32 %v180, 2147483648
    %v214 = vxor.u32 %v183, 2147483648
    %v215 = vxor.u32 %v186, 2147483648
    %v216 = vxor.u32 %v189, 2147483648
    %v217 = vxor.u32 %v192, 2147483648
    %v218 = vxor.u32 %v195, 2147483648
    %v219 = vxor.u32 %v198, 2147483648
    %v220 = vxor.u32 %v201, 2147483648
    %v221 = vxor.u32 %v204, 2147483648
    %v222 = vmul.f32 %v206, 1.442695
    %v223 = vpow.pop %v222
    %v224 = vmul.f32 %v207, 1.442695
    %v225 = vpow.pop %v224
    %v226 = vmul.f32 %v208, 1.442695
    %v227 = vpow.pop %v226
    %v228 = vmul.f32 %v209, 1.442695
    %v229 = vpow.pop %v228
    %v230 = vmul.f32 %v210, 1.442695
    %v231 = vpow.pop %v230
    %v232 = vmul.f32 %v211, 1.442695
    %v233 = vpow.pop %v232
    %v234 = vmul.f32 %v212, 1.442695
    %v235 = vpow.pop %v234
    %v236 = vmul.f32 %v213, 1.442695
    %v237 = vpow.pop %v236
    %v238 = vmul.f32 %v214, 1.442695
    %v239 = vpow.pop %v238
    %v240 = vmul.f32 %v215, 1.442695
    %v241 = vpow.pop %v240
    %v242 = vmul.f32 %v216, 1.442695
    %v243 = vpow.pop %v242
    %v244 = vmul.f32 %v217, 1.442695
    %v245 = vpow.pop %v244
    %v246 = vmul.f32 %v218, 1.442695
    %v247 = vpow.pop %v246
    %v248 = vmul.f32 %v219, 1.442695
    %v249 = vpow.pop %v248
    %v250 = vmul.f32 %v220, 1.442695
    %v251 = vpow.pop %v250
    %v252 = vmul.f32 %v221, 1.442695
    %v253 = vpow.pop %v252
    %v254 = vadd.f32 %v223, 1.0
    %v255 = vadd.f32 %v225, 1.0
    %v256 = vadd.f32 %v227, 1.0
    %v257 = vadd.f32 %v229, 1.0
    %v258 = vadd.f32 %v231, 1.0
    %v259 = vadd.f32 %v233, 1.0
    %v260 = vadd.f32 %v235, 1.0
    %v261 = vadd.f32 %v237, 1.0
    %v262 = vadd.f32 %v239, 1.0
    %v263 = vadd.f32 %v241, 1.0
    %v264 = vadd.f32 %v243, 1.0
    %v265 = vadd.f32 %v245, 1.0
    %v266 = vadd.f32 %v247, 1.0
    %v267 = vadd.f32 %v249, 1.0
    %v268 = vadd.f32 %v251, 1.0
    %v269 = vadd.f32 %v253, 1.0
    %v270 = vrcp.pop %v254
    %v271 = vmul.f32 %v254, %v270
    %v272 = vsub.f32 1.0, %v271
    %v273 = vmul.f32 %v270, %v272
    %v274 = vadd.f32 %v270, %v273
    %vm275 = vweird.f32 %v254
    %vm276 = vweird.f32 %v270
    %vm277 = vmor %vm275, %vm276
    %v278 = vsel %vm277, %v270, %v274
    %v279 = vand.u32 2147483647, %v254
    %vm280 = vcmp.eq.f32.partialorder %v279, 8.507059e+37
    %v281 = vand.u32 %v254, 2147483648
    %v282 = vor.u32 1.1754944e-38, %v281
    %v283 = vsel %vm280, %v282, %v278
    %v284 = vmul.f32 1.0, %v283
    %v285 = vrcp.pop %v255
    %v286 = vmul.f32 %v255, %v285
    %v287 = vsub.f32 1.0, %v286
    %v288 = vmul.f32 %v285, %v287
    %v289 = vadd.f32 %v285, %v288
    %vm290 = vweird.f32 %v255
    %vm291 = vweird.f32 %v285
    %vm292 = vmor %vm290, %vm291
    %v293 = vsel %vm292, %v285, %v289
    %v294 = vand.u32 2147483647, %v255
    %vm295 = vcmp.eq.f32.partialorder %v294, 8.507059e+37
    %v296 = vand.u32 %v255, 2147483648
    %v297 = vor.u32 1.1754944e-38, %v296
    %v298 = vsel %vm295, %v297, %v293
    %v299 = vmul.f32 1.0, %v298
    %v300 = vrcp.pop %v256
    %v301 = vmul.f32 %v256, %v300
    %v302 = vsub.f32 1.0, %v301
    %v303 = vmul.f32 %v300, %v302
    %v304 = vadd.f32 %v300, %v303
    %vm305 = vweird.f32 %v256
    %vm306 = vweird.f32 %v300
    %vm307 = vmor %vm305, %vm306
    %v308 = vsel %vm307, %v300, %v304
    %v309 = vand.u32 2147483647, %v256
    %vm310 = vcmp.eq.f32.partialorder %v309, 8.507059e+37
    %v311 = vand.u32 %v256, 2147483648
    %v312 = vor.u32 1.1754944e-38, %v311
    %v313 = vsel %vm310, %v312, %v308
    %v314 = vmul.f32 1.0, %v313
    %v315 = vrcp.pop %v257
    %v316 = vmul.f32 %v257, %v315
    %v317 = vsub.f32 1.0, %v316
    %v318 = vmul.f32 %v315, %v317
    %v319 = vadd.f32 %v315, %v318
    %vm320 = vweird.f32 %v257
    %vm321 = vweird.f32 %v315
    %vm322 = vmor %vm320, %vm321
    %v323 = vsel %vm322, %v315, %v319
    %v324 = vand.u32 2147483647, %v257
    %vm325 = vcmp.eq.f32.partialorder %v324, 8.507059e+37
    %v326 = vand.u32 %v257, 2147483648
    %v327 = vor.u32 1.1754944e-38, %v326
    %v328 = vsel %vm325, %v327, %v323
    %v329 = vmul.f32 1.0, %v328
    %v330 = vrcp.pop %v258
    %v331 = vmul.f32 %v258, %v330
    %v332 = vsub.f32 1.0, %v331
    %v333 = vmul.f32 %v330, %v332
    %v334 = vadd.f32 %v330, %v333
    %vm335 = vweird.f32 %v258
    %vm336 = vweird.f32 %v330
    %vm337 = vmor %vm335, %vm336
    %v338 = vsel %vm337, %v330, %v334
    %v339 = vand.u32 2147483647, %v258
    %vm340 = vcmp.eq.f32.partialorder %v339, 8.507059e+37
    %v341 = vand.u32 %v258, 2147483648
    %v342 = vor.u32 1.1754944e-38, %v341
    %v343 = vsel %vm340, %v342, %v338
    %v344 = vmul.f32 1.0, %v343
    %v345 = vrcp.pop %v259
    %v346 = vmul.f32 %v259, %v345
    %v347 = vsub.f32 1.0, %v346
    %v348 = vmul.f32 %v345, %v347
    %v349 = vadd.f32 %v345, %v348
    %vm350 = vweird.f32 %v259
    %vm351 = vweird.f32 %v345
    %vm352 = vmor %vm350, %vm351
    %v353 = vsel %vm352, %v345, %v349
    %v354 = vand.u32 2147483647, %v259
    %vm355 = vcmp.eq.f32.partialorder %v354, 8.507059e+37
    %v356 = vand.u32 %v259, 2147483648
    %v357 = vor.u32 1.1754944e-38, %v356
    %v358 = vsel %vm355, %v357, %v353
    %v359 = vmul.f32 1.0, %v358
    %v360 = vrcp.pop %v260
    %v361 = vmul.f32 %v260, %v360
    %v362 = vsub.f32 1.0, %v361
    %v363 = vmul.f32 %v360, %v362
    %v364 = vadd.f32 %v360, %v363
    %vm365 = vweird.f32 %v260
    %vm366 = vweird.f32 %v360
    %vm367 = vmor %vm365, %vm366
    %v368 = vsel %vm367, %v360, %v364
    %v369 = vand.u32 2147483647, %v260
    %vm370 = vcmp.eq.f32.partialorder %v369, 8.507059e+37
    %v371 = vand.u32 %v260, 2147483648
    %v372 = vor.u32 1.1754944e-38, %v371
    %v373 = vsel %vm370, %v372, %v368
    %v374 = vmul.f32 1.0, %v373
    %v375 = vrcp.pop %v261
    %v376 = vmul.f32 %v261, %v375
    %v377 = vsub.f32 1.0, %v376
    %v378 = vmul.f32 %v375, %v377
    %v379 = vadd.f32 %v375, %v378
    %vm380 = vweird.f32 %v261
    %vm381 = vweird.f32 %v375
    %vm382 = vmor %vm380, %vm381
    %v383 = vsel %vm382, %v375, %v379
    %v384 = vand.u32 2147483647, %v261
    %vm385 = vcmp.eq.f32.partialorder %v384, 8.507059e+37
    %v386 = vand.u32 %v261, 2147483648
    %v387 = vor.u32 1.1754944e-38, %v386
    %v388 = vsel %vm385, %v387, %v383
    %v389 = vmul.f32 1.0, %v388
    %v390 = vrcp.pop %v262
    %v391 = vmul.f32 %v262, %v390
    %v392 = vsub.f32 1.0, %v391
    %v393 = vmul.f32 %v390, %v392
    %v394 = vadd.f32 %v390, %v393
    %vm395 = vweird.f32 %v262
    %vm396 = vweird.f32 %v390
    %vm397 = vmor %vm395, %vm396
    %v398 = vsel %vm397, %v390, %v394
    %v399 = vand.u32 2147483647, %v262
    %vm400 = vcmp.eq.f32.partialorder %v399, 8.507059e+37
    %v401 = vand.u32 %v262, 2147483648
    %v402 = vor.u32 1.1754944e-38, %v401
    %v403 = vsel %vm400, %v402, %v398
    %v404 = vmul.f32 1.0, %v403
    %v405 = vrcp.pop %v263
    %v406 = vmul.f32 %v263, %v405
    %v407 = vsub.f32 1.0, %v406
    %v408 = vmul.f32 %v405, %v407
    %v409 = vadd.f32 %v405, %v408
    %vm410 = vweird.f32 %v263
    %vm411 = vweird.f32 %v405
    %vm412 = vmor %vm410, %vm411
    %v413 = vsel %vm412, %v405, %v409
    %v414 = vand.u32 2147483647, %v263
    %vm415 = vcmp.eq.f32.partialorder %v414, 8.507059e+37
    %v416 = vand.u32 %v263, 2147483648
    %v417 = vor.u32 1.1754944e-38, %v416
    %v418 = vsel %vm415, %v417, %v413
    %v419 = vmul.f32 1.0, %v418
    %v420 = vrcp.pop %v264
    %v421 = vmul.f32 %v264, %v420
    %v422 = vsub.f32 1.0, %v421
    %v423 = vmul.f32 %v420, %v422
    %v424 = vadd.f32 %v420, %v423
    %vm425 = vweird.f32 %v264
    %vm426 = vweird.f32 %v420
    %vm427 = vmor %vm425, %vm426
    %v428 = vsel %vm427, %v420, %v424
    %v429 = vand.u32 2147483647, %v264
    %vm430 = vcmp.eq.f32.partialorder %v429, 8.507059e+37
    %v431 = vand.u32 %v264, 2147483648
    %v432 = vor.u32 1.1754944e-38, %v431
    %v433 = vsel %vm430, %v432, %v428
    %v434 = vmul.f32 1.0, %v433
    %v435 = vrcp.pop %v265
    %v436 = vmul.f32 %v265, %v435
    %v437 = vsub.f32 1.0, %v436
    %v438 = vmul.f32 %v435, %v437
    %v439 = vadd.f32 %v435, %v438
    %vm440 = vweird.f32 %v265
    %vm441 = vweird.f32 %v435
    %vm442 = vmor %vm440, %vm441
    %v443 = vsel %vm442, %v435, %v439
    %v444 = vand.u32 2147483647, %v265
    %vm445 = vcmp.eq.f32.partialorder %v444, 8.507059e+37
    %v446 = vand.u32 %v265, 2147483648
    %v447 = vor.u32 1.1754944e-38, %v446
    %v448 = vsel %vm445, %v447, %v443
    %v449 = vmul.f32 1.0, %v448
    %v450 = vrcp.pop %v266
    %v451 = vmul.f32 %v266, %v450
    %v452 = vsub.f32 1.0, %v451
    %v453 = vmul.f32 %v450, %v452
    %v454 = vadd.f32 %v450, %v453
    %vm455 = vweird.f32 %v266
    %vm456 = vweird.f32 %v450
    %vm457 = vmor %vm455, %vm456
    %v458 = vsel %vm457, %v450, %v454
    %v459 = vand.u32 2147483647, %v266
    %vm460 = vcmp.eq.f32.partialorder %v459, 8.507059e+37
    %v461 = vand.u32 %v266, 2147483648
    %v462 = vor.u32 1.1754944e-38, %v461
    %v463 = vsel %vm460, %v462, %v458
    %v464 = vmul.f32 1.0, %v463
    %v465 = vrcp.pop %v267
    %v466 = vmul.f32 %v267, %v465
    %v467 = vsub.f32 1.0, %v466
    %v468 = vmul.f32 %v465, %v467
    %v469 = vadd.f32 %v465, %v468
    %vm470 = vweird.f32 %v267
    %vm471 = vweird.f32 %v465
    %vm472 = vmor %vm470, %vm471
    %v473 = vsel %vm472, %v465, %v469
    %v474 = vand.u32 2147483647, %v267
    %vm475 = vcmp.eq.f32.partialorder %v474, 8.507059e+37
    %v476 = vand.u32 %v267, 2147483648
    %v477 = vor.u32 1.1754944e-38, %v476
    %v478 = vsel %vm475, %v477, %v473
    %v479 = vmul.f32 1.0, %v478
    %v480 = vrcp.pop %v268
    %v481 = vmul.f32 %v268, %v480
    %v482 = vsub.f32 1.0, %v481
    %v483 = vmul.f32 %v480, %v482
    %v484 = vadd.f32 %v480, %v483
    %vm485 = vweird.f32 %v268
    %vm486 = vweird.f32 %v480
    %vm487 = vmor %vm485, %vm486
    %v488 = vsel %vm487, %v480, %v484
    %v489 = vand.u32 2147483647, %v268
    %vm490 = vcmp.eq.f32.partialorder %v489, 8.507059e+37
    %v491 = vand.u32 %v268, 2147483648
    %v492 = vor.u32 1.1754944e-38, %v491
    %v493 = vsel %vm490, %v492, %v488
    %v494 = vmul.f32 1.0, %v493
    %v495 = vrcp.pop %v269
    %v496 = vmul.f32 %v269, %v495
    %v497 = vsub.f32 1.0, %v496
    %v498 = vmul.f32 %v495, %v497
    %v499 = vadd.f32 %v495, %v498
    %vm500 = vweird.f32 %v269
    %vm501 = vweird.f32 %v495
    %vm502 = vmor %vm500, %vm501
    %v503 = vsel %vm502, %v495, %v499
    %v504 = vand.u32 2147483647, %v269
    %vm505 = vcmp.eq.f32.partialorder %v504, 8.507059e+37
    %v506 = vand.u32 %v269, 2147483648
    %v507 = vor.u32 1.1754944e-38, %v506
    %v508 = vsel %vm505, %v507, %v503
    %v509 = vmul.f32 1.0, %v508
    %v510 = vpack.c.bf16 %v284, %v284
    %v511 = vpack.c.bf16 %v299, %v299
    %v512 = vpack.c.bf16 %v314, %v314
    %v513 = vpack.c.bf16 %v329, %v329
    %v514 = vpack.c.bf16 %v344, %v344
    %v515 = vpack.c.bf16 %v359, %v359
    %v516 = vpack.c.bf16 %v374, %v374
    %v517 = vpack.c.bf16 %v389, %v389
    %v518 = vpack.c.bf16 %v404, %v404
    %v519 = vpack.c.bf16 %v419, %v419
    %v520 = vpack.c.bf16 %v434, %v434
    %v521 = vpack.c.bf16 %v449, %v449
    %v522 = vpack.c.bf16 %v464, %v464
    %v523 = vpack.c.bf16 %v479, %v479
    %v524 = vpack.c.bf16 %v494, %v494
    %v525 = vpack.c.bf16 %v509, %v509
    %526 = vst [vmem:[#allocation2] sm:$0xf] %v510
    %527 = vst [vmem:[#allocation2 + $0x4] sm:$0xf] %v511
    %528 = vst [vmem:[#allocation2 + $0x8] sm:$0xf] %v512
    %529 = vst [vmem:[#allocation2 + $0xc] sm:$0xf] %v513
    %530 = vst [vmem:[#allocation2 + $0x10] sm:$0xf] %v514
    %531 = vst [vmem:[#allocation2 + $0x14] sm:$0xf] %v515
    %532 = vst [vmem:[#allocation2 + $0x18] sm:$0xf] %v516
    %533 = vst [vmem:[#allocation2 + $0x1c] sm:$0xf] %v517
    %534 = vst [vmem:[#allocation2 + $0x20] sm:$0xf] %v518
    %535 = vst [vmem:[#allocation2 + $0x24] sm:$0xf] %v519
    %536 = vst [vmem:[#allocation2 + $0x28] sm:$0xf] %v520
    %537 = vst [vmem:[#allocation2 + $0x2c] sm:$0xf] %v521
    %538 = vst [vmem:[#allocation2 + $0x30] sm:$0xf] %v522
    %539 = vst [vmem:[#allocation2 + $0x34] sm:$0xf] %v523
    %540 = vst [vmem:[#allocation2 + $0x38] sm:$0xf] %v524
    %541 = vst [vmem:[#allocation2 + $0x3c] sm:$0xf] %v525
    // Predicated region
    $region10: #{vgae_forward.5} parent=1 // pred_check
      _
    $region11: #{vgae_forward.5} parent=1 // pred_check_branch
      %543 = sbr.rel (0) target = $region13
    $region12: #{vgae_forward.5} parent=1 // pred_region
      %545 = vsyncadd [#allocation3], 0
      %s546 = sshll.u32 [#allocation2], 4
      %s547 = int_to_ptr.vmem [resolvable:$true] %s546
      %s548 = sshll.u32 %s2, 4
      %s549 = int_to_ptr.hbm [resolvable:$true] %s548
      %554 = dma.vmem_to_hbm [thread:$0]  %s547, 1024, %s549, [#allocation3], 64, 64, 4
    $region13: #{vgae_forward.5} parent=1 // pred_fallthru
      _
    // Predicated region
    $region14: #{vgae_forward.5} parent=1 // pred_check
      _
    $region15: #{vgae_forward.5} parent=1 // pred_check_branch
      %556 = sbr.rel (0) target = $region17
    $region16: #{vgae_forward.5} parent=1 // pred_region
      %558 = dma.done [#allocation3], 1024
    $region17: #{vgae_forward.5} parent=1 // pred_fallthru
      _
    %559 = vsyncpa [#allocation3], 1

// kernel: vgae_forward.3
$region0: #{vgae_forward.3}
  #allocation0 [shape = 'u32[]', space=smem, size = 0x4, offset = 0x4, fixed_abs, tag = 'smem constant byte address 0x4 - core index']
  #allocation1 [shape = 'u32[72,128]{1,0:T(1,128)}', space=vmem, size = 0x9000, scoped, tag = 'internal scratch']
  #allocation2 [shape = 'f32[128,16]{1,0:T(8,128)}', space=vmem, size = 0x10000, scoped, tag = 'scratch operand']
  %s0 = inlined_call_operand.vmem [shape: bf16[128,128], index: 0, kind: input, shape index: {}]
  %s1 = inlined_call_operand.vmem [shape: bf16[128,16], index: 1, kind: input, shape index: {}]
  %s2 = inlined_call_operand.vmem [shape: bf16[16,32], index: 2, kind: input, shape index: {}]
  %s3 = inlined_call_operand.vmem [shape: bf16[128,32], index: 3, kind: output, shape index: {}]
  %s4 = sld [smem:[#allocation0]]
  $region30: #{vgae_forward.3} parent=0
    _
  %s6 = ssub.s32 1, %s4
  %s7 = scalar_select 0, %s6, %s4
  // Predicated region
  $region2: #{vgae_forward.3} parent=0 // pred_check
    _
  $region3: #{vgae_forward.3} parent=0 // pred_check_branch
    %9 = sbr.rel (0) target = $region5
  $region4: #{vgae_forward.3} parent=0 // pred_region
    _
  $region5: #{vgae_forward.3} parent=0 // pred_fallthru
    _
  // Predicated region
  $region6: #{vgae_forward.3} parent=0 // pred_check
    _
  $region7: #{vgae_forward.3} parent=0 // pred_check_branch
    %11 = sbr.rel (0) target = $region9
  $region8: #{vgae_forward.3} parent=0 // pred_region
    _
  $region9: #{vgae_forward.3} parent=0 // pred_fallthru
    _
  // Predicated region
  $region10: #{vgae_forward.3} parent=0 // pred_check
    _
  $region11: #{vgae_forward.3} parent=0 // pred_check_branch
    %13 = sbr.rel (0) target = $region13
  $region12: #{vgae_forward.3} parent=0 // pred_region
    _
  $region13: #{vgae_forward.3} parent=0 // pred_fallthru
    _
  %p15 = scmp.eq.s32.totalorder 0, 0
  // Predicated region
  $region14: #{vgae_forward.3} parent=0 // pred_check
    %p16 = pneg %p15
  $region15: #{vgae_forward.3} parent=0 // pred_check_branch
    %18 = sbr.rel (%p16) target = $region17
  $region16: #{vgae_forward.3} parent=0 // pred_region
    %vm19 = vcmask 130048
    %20 = vst.msk [vmem:[#allocation2] sm:$0xff] %vm19, 0.0
    %21 = vst.msk [vmem:[#allocation2 + $0x8] sm:$0xff] %vm19, 0.0
    %22 = vst.msk [vmem:[#allocation2 + $0x10] sm:$0xff] %vm19, 0.0
    %23 = vst.msk [vmem:[#allocation2 + $0x18] sm:$0xff] %vm19, 0.0
    %24 = vst.msk [vmem:[#allocation2 + $0x20] sm:$0xff] %vm19, 0.0
    %25 = vst.msk [vmem:[#allocation2 + $0x28] sm:$0xff] %vm19, 0.0
    %26 = vst.msk [vmem:[#allocation2 + $0x30] sm:$0xff] %vm19, 0.0
    %27 = vst.msk [vmem:[#allocation2 + $0x38] sm:$0xff] %vm19, 0.0
    %28 = vst.msk [vmem:[#allocation2 + $0x40] sm:$0xff] %vm19, 0.0
    %29 = vst.msk [vmem:[#allocation2 + $0x48] sm:$0xff] %vm19, 0.0
    %30 = vst.msk [vmem:[#allocation2 + $0x50] sm:$0xff] %vm19, 0.0
    %31 = vst.msk [vmem:[#allocation2 + $0x58] sm:$0xff] %vm19, 0.0
    %32 = vst.msk [vmem:[#allocation2 + $0x60] sm:$0xff] %vm19, 0.0
    %33 = vst.msk [vmem:[#allocation2 + $0x68] sm:$0xff] %vm19, 0.0
    %34 = vst.msk [vmem:[#allocation2 + $0x70] sm:$0xff] %vm19, 0.0
    %35 = vst.msk [vmem:[#allocation2 + $0x78] sm:$0xff] %vm19, 0.0
  $region17: #{vgae_forward.3} parent=0 // pred_fallthru
    _
  %v36 = vld [vmem:[#allocation2] sm:$0xff]
  %v37 = vld [vmem:[#allocation2 + $0x8] sm:$0xff]
  %v38 = vld [vmem:[#allocation2 + $0x10] sm:$0xff]
  %v39 = vld [vmem:[#allocation2 + $0x18] sm:$0xff]
  %v40 = vld [vmem:[#allocation2 + $0x20] sm:$0xff]
  %v41 = vld [vmem:[#allocation2 + $0x28] sm:$0xff]
  %v42 = vld [vmem:[#allocation2 + $0x30] sm:$0xff]
  %v43 = vld [vmem:[#allocation2 + $0x38] sm:$0xff]
  %v44 = vld [vmem:[#allocation2 + $0x40] sm:$0xff]
  %v45 = vld [vmem:[#allocation2 + $0x48] sm:$0xff]
  %v46 = vld [vmem:[#allocation2 + $0x50] sm:$0xff]
  %v47 = vld [vmem:[#allocation2 + $0x58] sm:$0xff]
  %v48 = vld [vmem:[#allocation2 + $0x60] sm:$0xff]
  %v49 = vld [vmem:[#allocation2 + $0x68] sm:$0xff]
  %v50 = vld [vmem:[#allocation2 + $0x70] sm:$0xff]
  %v51 = vld [vmem:[#allocation2 + $0x78] sm:$0xff]
  %v52 = vld [vmem:[%s0] sm:$0xf]
  %v53 = vld [vmem:[%s0 + $0x4] sm:$0xf]
  %v54 = vld [vmem:[%s0 + $0x8] sm:$0xf]
  %v55 = vld [vmem:[%s0 + $0xc] sm:$0xf]
  %v56 = vld [vmem:[%s0 + $0x10] sm:$0xf]
  %v57 = vld [vmem:[%s0 + $0x14] sm:$0xf]
  %v58 = vld [vmem:[%s0 + $0x18] sm:$0xf]
  %v59 = vld [vmem:[%s0 + $0x1c] sm:$0xf]
  %v60 = vld [vmem:[%s0 + $0x20] sm:$0xf]
  %v61 = vld [vmem:[%s0 + $0x24] sm:$0xf]
  %v62 = vld [vmem:[%s0 + $0x28] sm:$0xf]
  %v63 = vld [vmem:[%s0 + $0x2c] sm:$0xf]
  %v64 = vld [vmem:[%s0 + $0x30] sm:$0xf]
  %v65 = vld [vmem:[%s0 + $0x34] sm:$0xf]
  %v66 = vld [vmem:[%s0 + $0x38] sm:$0xf]
  %v67 = vld [vmem:[%s0 + $0x3c] sm:$0xf]
  %v68 = vld [vmem:[%s1] sm:$0xf]
  %v69 = vld [vmem:[%s1 + $0x4] sm:$0xf]
  %v70 = vld [vmem:[%s1 + $0x8] sm:$0xf]
  %v71 = vld [vmem:[%s1 + $0xc] sm:$0xf]
  %v72 = vld [vmem:[%s1 + $0x10] sm:$0xf]
  %v73 = vld [vmem:[%s1 + $0x14] sm:$0xf]
  %v74 = vld [vmem:[%s1 + $0x18] sm:$0xf]
  %v75 = vld [vmem:[%s1 + $0x1c] sm:$0xf]
  %v76 = vld [vmem:[%s1 + $0x20] sm:$0xf]
  %v77 = vld [vmem:[%s1 + $0x24] sm:$0xf]
  %v78 = vld [vmem:[%s1 + $0x28] sm:$0xf]
  %v79 = vld [vmem:[%s1 + $0x2c] sm:$0xf]
  %v80 = vld [vmem:[%s1 + $0x30] sm:$0xf]
  %v81 = vld [vmem:[%s1 + $0x34] sm:$0xf]
  %v82 = vld [vmem:[%s1 + $0x38] sm:$0xf]
  %v83 = vld [vmem:[%s1 + $0x3c] sm:$0xf]
  %v100 = vunpack.c.l.b16 %v52
  %v101 = vunpack.c.l.b16 %v53
  %v102 = vunpack.c.l.b16 %v54
  %v103 = vunpack.c.l.b16 %v55
  %v104 = vunpack.c.l.b16 %v56
  %v105 = vunpack.c.l.b16 %v57
  %v106 = vunpack.c.l.b16 %v58
  %v107 = vunpack.c.l.b16 %v59
  %v108 = vunpack.c.l.b16 %v60
  %v109 = vunpack.c.l.b16 %v61
  %v110 = vunpack.c.l.b16 %v62
  %v111 = vunpack.c.l.b16 %v63
  %v112 = vunpack.c.l.b16 %v64
  %v113 = vunpack.c.l.b16 %v65
  %v114 = vunpack.c.l.b16 %v66
  %v115 = vunpack.c.l.b16 %v67
  %v116 = vpack.c.b16 %v101, %v100
  %v117 = vpack.c.b16 %v103, %v102
  %v118 = vpack.c.b16 %v105, %v104
  %v119 = vpack.c.b16 %v107, %v106
  %v120 = vpack.c.b16 %v109, %v108
  %v121 = vpack.c.b16 %v111, %v110
  %v122 = vpack.c.b16 %v113, %v112
  %v123 = vpack.c.b16 %v115, %v114
  %v148 = vunpack.c.l.b16 %v68
  %v149 = vunpack.c.l.b16 %v69
  %v150 = vunpack.c.l.b16 %v70
  %v151 = vunpack.c.l.b16 %v71
  %v152 = vunpack.c.l.b16 %v72
  %v153 = vunpack.c.l.b16 %v73
  %v154 = vunpack.c.l.b16 %v74
  %v155 = vunpack.c.l.b16 %v75
  %v156 = vunpack.c.l.b16 %v76
  %v157 = vunpack.c.l.b16 %v77
  %v158 = vunpack.c.l.b16 %v78
  %v159 = vunpack.c.l.b16 %v79
  %v160 = vunpack.c.l.b16 %v80
  %v161 = vunpack.c.l.b16 %v81
  %v162 = vunpack.c.l.b16 %v82
  %v163 = vunpack.c.l.b16 %v83
  %v164 = vpack.c.b16 %v149, %v148
  %v165 = vpack.c.b16 %v151, %v150
  %v166 = vpack.c.b16 %v153, %v152
  %v167 = vpack.c.b16 %v155, %v154
  %v168 = vpack.c.b16 %v157, %v156
  %v169 = vpack.c.b16 %v159, %v158
  %v170 = vpack.c.b16 %v161, %v160
  %v171 = vpack.c.b16 %v163, %v162
  %180 = vmatpush.bf16.msra.mxu0 %v171
  %181 = vmatpush.bf16.msra.mxu0 %v170
  %182 = vmatpush.bf16.msra.mxu0 %v169
  %183 = vmatpush.bf16.msra.mxu0 %v168
  %184 = vmatpush.bf16.msra.mxu0 %v167
  %185 = vmatpush.bf16.msra.mxu0 %v166
  %186 = vmatpush.bf16.msra.mxu0 %v165
  %187 = vmatpush.bf16.msra.mxu0 %v164
  %188 = vmatmul.bf16.gmra.mxu0 %v116
  %v189 = vpop.f32.mrf.mxu0
  %v190 = vadd.f32 0.0, %v189
  %v191 = vpop.f32.mrf.mxu0
  %v192 = vadd.f32 0.0, %v191
  %193 = vmatmul.bf16.gmra.mxu0 %v117
  %v194 = vpop.f32.mrf.mxu0
  %v195 = vadd.f32 0.0, %v194
  %v196 = vpop.f32.mrf.mxu0
  %v197 = vadd.f32 0.0, %v196
  %198 = vmatmul.bf16.gmra.mxu0 %v118
  %v199 = vpop.f32.mrf.mxu0
  %v200 = vadd.f32 0.0, %v199
  %v201 = vpop.f32.mrf.mxu0
  %v202 = vadd.f32 0.0, %v201
  %203 = vmatmul.bf16.gmra.mxu0 %v119
  %v204 = vpop.f32.mrf.mxu0
  %v205 = vadd.f32 0.0, %v204
  %v206 = vpop.f32.mrf.mxu0
  %v207 = vadd.f32 0.0, %v206
  %208 = vmatmul.bf16.gmra.mxu0 %v120
  %v209 = vpop.f32.mrf.mxu0
  %v210 = vadd.f32 0.0, %v209
  %v211 = vpop.f32.mrf.mxu0
  %v212 = vadd.f32 0.0, %v211
  %213 = vmatmul.bf16.gmra.mxu0 %v121
  %v214 = vpop.f32.mrf.mxu0
  %v215 = vadd.f32 0.0, %v214
  %v216 = vpop.f32.mrf.mxu0
  %v217 = vadd.f32 0.0, %v216
  %218 = vmatmul.bf16.gmra.mxu0 %v122
  %v219 = vpop.f32.mrf.mxu0
  %v220 = vadd.f32 0.0, %v219
  %v221 = vpop.f32.mrf.mxu0
  %v222 = vadd.f32 0.0, %v221
  %223 = vmatmul.bf16.gmra.mxu0 %v123
  %v224 = vpop.f32.mrf.mxu0
  %v225 = vadd.f32 0.0, %v224
  %v226 = vpop.f32.mrf.mxu0
  %v227 = vadd.f32 0.0, %v226
  %228 = vdwg.mxu0
  %v229 = vadd.f32 %v36, %v190
  %v230 = vadd.f32 %v37, %v192
  %v231 = vadd.f32 %v38, %v195
  %v232 = vadd.f32 %v39, %v197
  %v233 = vadd.f32 %v40, %v200
  %v234 = vadd.f32 %v41, %v202
  %v235 = vadd.f32 %v42, %v205
  %v236 = vadd.f32 %v43, %v207
  %v237 = vadd.f32 %v44, %v210
  %v238 = vadd.f32 %v45, %v212
  %v239 = vadd.f32 %v46, %v215
  %v240 = vadd.f32 %v47, %v217
  %v241 = vadd.f32 %v48, %v220
  %v242 = vadd.f32 %v49, %v222
  %v243 = vadd.f32 %v50, %v225
  %v244 = vadd.f32 %v51, %v227
  %vm245 = vcmask 130048
  %246 = vst.msk [vmem:[#allocation2] sm:$0xff] %vm245, %v229
  %247 = vst.msk [vmem:[#allocation2 + $0x8] sm:$0xff] %vm245, %v230
  %248 = vst.msk [vmem:[#allocation2 + $0x10] sm:$0xff] %vm245, %v231
  %249 = vst.msk [vmem:[#allocation2 + $0x18] sm:$0xff] %vm245, %v232
  %250 = vst.msk [vmem:[#allocation2 + $0x20] sm:$0xff] %vm245, %v233
  %251 = vst.msk [vmem:[#allocation2 + $0x28] sm:$0xff] %vm245, %v234
  %252 = vst.msk [vmem:[#allocation2 + $0x30] sm:$0xff] %vm245, %v235
  %253 = vst.msk [vmem:[#allocation2 + $0x38] sm:$0xff] %vm245, %v236
  %254 = vst.msk [vmem:[#allocation2 + $0x40] sm:$0xff] %vm245, %v237
  %255 = vst.msk [vmem:[#allocation2 + $0x48] sm:$0xff] %vm245, %v238
  %256 = vst.msk [vmem:[#allocation2 + $0x50] sm:$0xff] %vm245, %v239
  %257 = vst.msk [vmem:[#allocation2 + $0x58] sm:$0xff] %vm245, %v240
  %258 = vst.msk [vmem:[#allocation2 + $0x60] sm:$0xff] %vm245, %v241
  %259 = vst.msk [vmem:[#allocation2 + $0x68] sm:$0xff] %vm245, %v242
  %260 = vst.msk [vmem:[#allocation2 + $0x70] sm:$0xff] %vm245, %v243
  %261 = vst.msk [vmem:[#allocation2 + $0x78] sm:$0xff] %vm245, %v244
  // Predicated region
  $region18: #{vgae_forward.3} parent=0 // pred_check
    %p262 = pneg %p15
  $region19: #{vgae_forward.3} parent=0 // pred_check_branch
    %264 = sbr.rel (%p262) target = $region21
  $region20: #{vgae_forward.3} parent=0 // pred_region
    %v265 = vld [vmem:[#allocation2] sm:$0xff]
    %v266 = vld [vmem:[#allocation2 + $0x8] sm:$0xff]
    %v267 = vld [vmem:[#allocation2 + $0x10] sm:$0xff]
    %v268 = vld [vmem:[#allocation2 + $0x18] sm:$0xff]
    %v269 = vld [vmem:[#allocation2 + $0x20] sm:$0xff]
    %v270 = vld [vmem:[#allocation2 + $0x28] sm:$0xff]
    %v271 = vld [vmem:[#allocation2 + $0x30] sm:$0xff]
    %v272 = vld [vmem:[#allocation2 + $0x38] sm:$0xff]
    %v273 = vld [vmem:[#allocation2 + $0x40] sm:$0xff]
    %v274 = vld [vmem:[#allocation2 + $0x48] sm:$0xff]
    %v275 = vld [vmem:[#allocation2 + $0x50] sm:$0xff]
    %v276 = vld [vmem:[#allocation2 + $0x58] sm:$0xff]
    %v277 = vld [vmem:[#allocation2 + $0x60] sm:$0xff]
    %v278 = vld [vmem:[#allocation2 + $0x68] sm:$0xff]
    %v279 = vld [vmem:[#allocation2 + $0x70] sm:$0xff]
    %v280 = vld [vmem:[#allocation2 + $0x78] sm:$0xff]
    %v281 = vpack.c.bf16 %v266, %v265
    %v282 = vpack.c.bf16 %v268, %v267
    %v283 = vpack.c.bf16 %v270, %v269
    %v284 = vpack.c.bf16 %v272, %v271
    %v285 = vpack.c.bf16 %v274, %v273
    %v286 = vpack.c.bf16 %v276, %v275
    %v287 = vpack.c.bf16 %v278, %v277
    %v288 = vpack.c.bf16 %v280, %v279
    %v289 = vld [vmem:[%s2] sm:$0xf]
    %v290 = vld [vmem:[%s2 + $0x4] sm:$0xf]
    %v293 = vunpack.c.l.b16 %v289
    %v294 = vunpack.c.l.b16 %v290
    %v295 = vpack.c.b16 %v294, %v293
    %v298 = vsel %vm245, %v281, 0
    %v301 = vsel %vm245, %v282, 0
    %v304 = vsel %vm245, %v283, 0
    %v307 = vsel %vm245, %v284, 0
    %v310 = vsel %vm245, %v285, 0
    %v313 = vsel %vm245, %v286, 0
    %v316 = vsel %vm245, %v287, 0
    %v319 = vsel %vm245, %v288, 0
    %321 = vmatpush.bf16.msra.mxu0 0
    %322 = vmatpush.bf16.msra.mxu0 0
    %323 = vmatpush.bf16.msra.mxu0 0
    %324 = vmatpush.bf16.msra.mxu0 0
    %325 = vmatpush.bf16.msra.mxu0 0
    %326 = vmatpush.bf16.msra.mxu0 0
    %327 = vmatpush.bf16.msra.mxu0 0
    %328 = vmatpush.bf16.msra.mxu0 %v295
    %329 = vmatmul.bf16.gmra.mxu0 %v298
    %v330 = vpop.f32.mrf.mxu0
    %v331 = vadd.f32 0.0, %v330
    %v332 = vpop.f32.mrf.mxu0
    %v333 = vadd.f32 0.0, %v332
    %334 = vmatmul.bf16.gmra.mxu0 %v301
    %v335 = vpop.f32.mrf.mxu0
    %v336 = vadd.f32 0.0, %v335
    %v337 = vpop.f32.mrf.mxu0
    %v338 = vadd.f32 0.0, %v337
    %339 = vmatmul.bf16.gmra.mxu0 %v304
    %v340 = vpop.f32.mrf.mxu0
    %v341 = vadd.f32 0.0, %v340
    %v342 = vpop.f32.mrf.mxu0
    %v343 = vadd.f32 0.0, %v342
    %344 = vmatmul.bf16.gmra.mxu0 %v307
    %v345 = vpop.f32.mrf.mxu0
    %v346 = vadd.f32 0.0, %v345
    %v347 = vpop.f32.mrf.mxu0
    %v348 = vadd.f32 0.0, %v347
    %349 = vmatmul.bf16.gmra.mxu0 %v310
    %v350 = vpop.f32.mrf.mxu0
    %v351 = vadd.f32 0.0, %v350
    %v352 = vpop.f32.mrf.mxu0
    %v353 = vadd.f32 0.0, %v352
    %354 = vmatmul.bf16.gmra.mxu0 %v313
    %v355 = vpop.f32.mrf.mxu0
    %v356 = vadd.f32 0.0, %v355
    %v357 = vpop.f32.mrf.mxu0
    %v358 = vadd.f32 0.0, %v357
    %359 = vmatmul.bf16.gmra.mxu0 %v316
    %v360 = vpop.f32.mrf.mxu0
    %v361 = vadd.f32 0.0, %v360
    %v362 = vpop.f32.mrf.mxu0
    %v363 = vadd.f32 0.0, %v362
    %364 = vmatmul.bf16.gmra.mxu0 %v319
    %v365 = vpop.f32.mrf.mxu0
    %v366 = vadd.f32 0.0, %v365
    %v367 = vpop.f32.mrf.mxu0
    %v368 = vadd.f32 0.0, %v367
    %369 = vdwg.mxu0
    %v370 = vmax.f32 %v331, 0.0
    %v371 = vmax.f32 %v333, 0.0
    %v372 = vmax.f32 %v336, 0.0
    %v373 = vmax.f32 %v338, 0.0
    %v374 = vmax.f32 %v341, 0.0
    %v375 = vmax.f32 %v343, 0.0
    %v376 = vmax.f32 %v346, 0.0
    %v377 = vmax.f32 %v348, 0.0
    %v378 = vmax.f32 %v351, 0.0
    %v379 = vmax.f32 %v353, 0.0
    %v380 = vmax.f32 %v356, 0.0
    %v381 = vmax.f32 %v358, 0.0
    %v382 = vmax.f32 %v361, 0.0
    %v383 = vmax.f32 %v363, 0.0
    %v384 = vmax.f32 %v366, 0.0
    %v385 = vmax.f32 %v368, 0.0
    %v386 = vpack.c.bf16 %v370, %v370
    %v387 = vpack.c.bf16 %v371, %v371
    %v388 = vpack.c.bf16 %v372, %v372
    %v389 = vpack.c.bf16 %v373, %v373
    %v390 = vpack.c.bf16 %v374, %v374
    %v391 = vpack.c.bf16 %v375, %v375
    %v392 = vpack.c.bf16 %v376, %v376
    %v393 = vpack.c.bf16 %v377, %v377
    %v394 = vpack.c.bf16 %v378, %v378
    %v395 = vpack.c.bf16 %v379, %v379
    %v396 = vpack.c.bf16 %v380, %v380
    %v397 = vpack.c.bf16 %v381, %v381
    %v398 = vpack.c.bf16 %v382, %v382
    %v399 = vpack.c.bf16 %v383, %v383
    %v400 = vpack.c.bf16 %v384, %v384
    %v401 = vpack.c.bf16 %v385, %v385
    %vm402 = vcmask 257024
    %403 = vst.msk [vmem:[%s3] sm:$0xf] %vm402, %v386
    %404 = vst.msk [vmem:[%s3 + $0x4] sm:$0xf] %vm402, %v387
    %405 = vst.msk [vmem:[%s3 + $0x8] sm:$0xf] %vm402, %v388
    %406 = vst.msk [vmem:[%s3 + $0xc] sm:$0xf] %vm402, %v389
    %407 = vst.msk [vmem:[%s3 + $0x10] sm:$0xf] %vm402, %v390
    %408 = vst.msk [vmem:[%s3 + $0x14] sm:$0xf] %vm402, %v391
    %409 = vst.msk [vmem:[%s3 + $0x18] sm:$0xf] %vm402, %v392
    %410 = vst.msk [vmem:[%s3 + $0x1c] sm:$0xf] %vm402, %v393
    %411 = vst.msk [vmem:[%s3 + $0x20] sm:$0xf] %vm402, %v394
    %412 = vst.msk [vmem:[%s3 + $0x24] sm:$0xf] %vm402, %v395
    %413 = vst.msk [vmem:[%s3 + $0x28] sm:$0xf] %vm402, %v396
    %414 = vst.msk [vmem:[%s3 + $0x2c] sm:$0xf] %vm402, %v397
    %415 = vst.msk [vmem:[%s3 + $0x30] sm:$0xf] %vm402, %v398
    %416 = vst.msk [vmem:[%s3 + $0x34] sm:$0xf] %vm402, %v399
    %417 = vst.msk [vmem:[%s3 + $0x38] sm:$0xf] %vm402, %v400
    %418 = vst.msk [vmem:[%s3 + $0x3c] sm:$0xf] %vm402, %v401
  $region21: #{vgae_forward.3} parent=0 // pred_fallthru
    _
  // Predicated region
  $region22: #{vgae_forward.3} parent=0 // pred_check
    _
  $region23: #{vgae_forward.3} parent=0 // pred_check_branch
    %420 = sbr.rel (0) target = $region25
  $region24: #{vgae_forward.3} parent=0 // pred_region
    _
  $region25: #{vgae_forward.3} parent=0 // pred_fallthru
    _
  // Predicated region
  $region26: #{vgae_forward.3} parent=0 // pred_check
    _
  $region27: #{vgae_forward.3} parent=0 // pred_check_branch
    %422 = sbr.rel (0) target = $region29
  $region28: #{vgae_forward.3} parent=0 // pred_region
    _
  $region29: #{vgae_forward.3} parent=0 // pred_fallthru
    _

</llo_original>
